<compile_context>
chip_gen: v7x
topology: tpu7x:2x2x1
jax: 0.10.0
libtpu: 0.0.40
codegen_flags: <defaults>
</compile_context>

<pallas_src>
import functools

import jax
import jax.numpy as jnp
from jax.experimental import pallas as pl
from jax.experimental.pallas import tpu as pltpu


def _mxu_dot(a, b):
    # `b` (the weight) carries the matmul dtype chosen in the wrapper; cast the
    # activation operand to match so the MXU runs at native bf16 rate in the
    # production path.  Accumulation stays float32 either way.
    return jnp.dot(a.astype(b.dtype), b, preferred_element_type=jnp.float32)


def _layernorm(x, scale, shift, eps=1e-5):
    # One-pass stats: halves the cross-lane reductions (XLU); rsqrt issues on
    # the EUP instead of a VALU divide chain.  Fine at f32 for O(1) activations.
    mean = jnp.mean(x, axis=-1, keepdims=True)
    msq = jnp.mean(x * x, axis=-1, keepdims=True)
    var = msq - mean * mean
    inv = jax.lax.rsqrt(var + eps)
    return scale * ((x - mean) * inv) + shift


def _gelu_tanh(x):
    c = jnp.sqrt(2.0 / jnp.pi).astype(x.dtype)
    return 0.5 * x * (1.0 + jnp.tanh(c * (x + 0.044715 * x * x * x)))


def transformer_block_kernel(
    x_ref,
    ln1_s_ref, ln1_b_ref,
    wqkv_ref,                       # fused (E, 3E), possibly bf16
    wo_ref, bo_ref,
    lnA_s_ref, lnA_b_ref,           # "dropout1" (actually a LayerNorm)
    ln2_s_ref, ln2_b_ref,
    w1_ref, b1_ref, w2_ref, b2_ref,
    lnB_s_ref, lnB_b_ref,           # "dropout2" (actually a LayerNorm)
    o_ref,
    ctx_ref,                        # VMEM scratch (Bt*T, E) f32 — per-head slab
    *, num_heads, approx_recip,
):
    x3 = x_ref[...].astype(jnp.float32)          # (Bt, T, E)
    Bt, T, E = x3.shape
    H = num_heads
    D = E // H
    M = Bt * T
    mm_dtype = wqkv_ref.dtype
    x2 = x3.reshape(M, E)                        # flatten token axis for matmuls

    # ---- norm1 ----
    xn = _layernorm(x2, ln1_s_ref[...], ln1_b_ref[...])

    # ---- fused QKV projection: one wide MXU matmul ----
    qkv = _mxu_dot(xn, wqkv_ref[...])            # (M, 3E), f32 accum
    inv_sqrt_d = jnp.float32(1.0) / jnp.sqrt(jnp.float32(D))
    q = (qkv[:, :E] * inv_sqrt_d).reshape(Bt, T, E)   # scale q once, not scores
    k = qkv[:, E:2 * E].reshape(Bt, T, E)
    v = qkv[:, 2 * E:].reshape(Bt, T, E)

    # ---- causal mask (built once, finite negative) ----
    row = jax.lax.broadcasted_iota(jnp.int32, (T, T), 0)
    col = jax.lax.broadcasted_iota(jnp.int32, (T, T), 1)
    causal = col > row
    neg = jnp.float32(-1e30)

    # ---- multi-head causal self-attention ----
    # Each head's context is written straight into the VMEM scratch slab, so no
    # lane concatenate and only one (Bt,T,T)/(Bt,T,D) pair is live at a time.
    for h in range(H):                           # static, small head loop
        sl = slice(h * D, (h + 1) * D)
        qh = q[:, :, sl].astype(mm_dtype)
        kh = k[:, :, sl].astype(mm_dtype)
        vh = v[:, :, sl].astype(mm_dtype)
        s = jnp.einsum('btd,bsd->bts', qh, kh,
                       preferred_element_type=jnp.float32)     # (Bt, T, T)
        s = jnp.where(causal, neg, s)
        s = s - jnp.max(s, axis=-1, keepdims=True)
        p = jnp.exp(s)
        p = p * pl.reciprocal(jnp.sum(p, axis=-1, keepdims=True),
                              approx=approx_recip)
        ctx_h = jnp.einsum('bts,bsd->btd', p.astype(mm_dtype), vh,
                           preferred_element_type=jnp.float32)  # (Bt, T, D)
        ctx_ref[:, h * D:(h + 1) * D] = ctx_h.reshape(M, D)

    # Single out-projection matmul on the lane-dense scratch slab.
    attn_out = _mxu_dot(ctx_ref[...], wo_ref[...]) + bo_ref[...]

    # ---- "dropout1" LayerNorm + residual ----
    x1 = _layernorm(attn_out, lnA_s_ref[...], lnA_b_ref[...]) + x2

    # ---- norm2 + feed-forward (Linear -> tanh-GELU -> Linear) ----
    xn2 = _layernorm(x1, ln2_s_ref[...], ln2_b_ref[...])
    hid = _mxu_dot(xn2, w1_ref[...]) + b1_ref[...]
    hid = _gelu_tanh(hid)
    ff = _mxu_dot(hid, w2_ref[...]) + b2_ref[...]

    # ---- "dropout2" LayerNorm + residual ----
    out = _layernorm(ff, lnB_s_ref[...], lnB_b_ref[...]) + x1
    # Note: at E=32 this store is lane-masked; at production E (multiple of 128)
    # it is lane-dense with this layout (E on lanes).
    o_ref[...] = out.reshape(Bt, T, E).astype(o_ref.dtype)


def _vmem_limit_bytes():
    # Generation-dependent cap: ~3/4 of physical VMEM, never above 100 MiB.
    # v5e/v6e (128 MiB) -> ~96 MiB; v7x (64 MiB) -> 48 MiB.
    try:
        cap = int(pltpu.get_tpu_info().vmem_capacity_bytes)
    except Exception:
        cap = 64 * 1024 * 1024
    return min((cap * 3) // 4, 100 * 1024 * 1024)


def transformer_block(x, params, num_heads, *, batch_tile=None,
                      matmul_dtype=jnp.float32, approx_recip=True):
    (ln1_s, ln1_b, wq, wk, wv, wo, bo, lnA_s, lnA_b,
     ln2_s, ln2_b, w1, b1, w2, b2, lnB_s, lnB_b) = params
    B, T, E = x.shape
    H4 = 4 * E
    D = E // num_heads

    if batch_tile is None:
        # >=2 grid steps so the "parallel" axis actually shards across v7x's two
        # TensorCores and the x-tile DMA pipelines behind compute.  On v5e/v6e
        # (single TC) keep tiles large — pass batch_tile=B there if preferred.
        batch_tile = B // 2 if (B >= 2 and B % 2 == 0) else B
    assert B % batch_tile == 0
    grid = (B // batch_tile,)

    # Fuse the three QKV projections into a single (E, 3E) weight; cast the big
    # matmul weights to matmul_dtype (bf16 in production).  Biases and LN
    # parameters stay f32 (cheap, and they add into f32 accumulators).
    wqkv = jnp.concatenate([wq, wk, wv], axis=1).astype(matmul_dtype)
    wo_c = wo.astype(matmul_dtype)
    w1_c = w1.astype(matmul_dtype)
    w2_c = w2.astype(matmul_dtype)

    def const_spec(shape):
        return pl.BlockSpec(shape, lambda b: (0, 0))

    def weight_spec(shape):
        # Block index never changes across the grid: single-buffer to halve the
        # VMEM reservation for the big weights.
        return pl.BlockSpec(shape, lambda b: (0, 0), pipeline_mode=pl.Buffered(1))

    in_specs = [
        pl.BlockSpec((batch_tile, T, E), lambda b: (b, 0, 0)),   # x
        const_spec((1, E)), const_spec((1, E)),                  # norm1 scale/shift
        weight_spec((E, 3 * E)),                                 # fused Wqkv
        weight_spec((E, E)), const_spec((1, E)),                 # Wo, bo
        const_spec((1, E)), const_spec((1, E)),                  # dropout1 (LN)
        const_spec((1, E)), const_spec((1, E)),                  # norm2
        weight_spec((E, H4)), const_spec((1, H4)),               # W1, b1
        weight_spec((H4, E)), const_spec((1, E)),                # W2, b2
        const_spec((1, E)), const_spec((1, E)),                  # dropout2 (LN)
    ]
    out_spec = pl.BlockSpec((batch_tile, T, E), lambda b: (b, 0, 0))

    # Advisory cost estimate for XLA's scheduler.
    M_tot = B * T
    flops = (2 * M_tot * E * 3 * E                  # fused QKV
             + 4 * B * num_heads * T * T * D        # QK^T + PV
             + 2 * M_tot * E * E                    # out projection
             + 4 * M_tot * E * H4)                  # FFN up + down
    transcendentals = (B * num_heads * T * T        # exp (softmax)
                       + M_tot * H4                 # tanh (GELU)
                       + 4 * M_tot)                 # rsqrt (4 LayerNorms)
    param_arrays = (ln1_s, ln1_b, wqkv, wo_c, bo, lnA_s, lnA_b,
                    ln2_s, ln2_b, w1_c, b1, w2_c, b2, lnB_s, lnB_b)
    bytes_accessed = 2 * x.size * x.dtype.itemsize + sum(
        int(p.size) * p.dtype.itemsize for p in param_arrays)
    cost = pl.CostEstimate(flops=flops, transcendentals=transcendentals,
                           bytes_accessed=bytes_accessed)

    kernel = functools.partial(transformer_block_kernel,
                               num_heads=num_heads, approx_recip=approx_recip)
    return pl.pallas_call(
        kernel,
        out_shape=jax.ShapeDtypeStruct((B, T, E), x.dtype),
        grid=grid,
        in_specs=in_specs,
        out_specs=out_spec,
        scratch_shapes=[pltpu.VMEM((batch_tile * T, E), jnp.float32)],
        compiler_params=pltpu.CompilerParams(
            dimension_semantics=("parallel",),       # batch tiles are independent
            vmem_limit_bytes=_vmem_limit_bytes(),
        ),
        cost_estimate=cost,
    )(x, ln1_s, ln1_b, wqkv, wo_c, bo, lnA_s, lnA_b,
      ln2_s, ln2_b, w1_c, b1, w2_c, b2, lnB_s, lnB_b)


# ---------------- pure-JAX reference (mirrors the PyTorch forward) ----------------
def ref_block(x, params, num_heads):
    (ln1_s, ln1_b, wq, wk, wv, wo, bo, lnA_s, lnA_b,
     ln2_s, ln2_b, w1, b1, w2, b2, lnB_s, lnB_b) = params
    B, T, E = x.shape
    D = E // num_heads

    def ln(z, s, b):
        m = z.mean(-1, keepdims=True)
        v = ((z - m) ** 2).mean(-1, keepdims=True)
        return s * (z - m) / jnp.sqrt(v + 1e-5) + b

    def gelu(z):
        return 0.5 * z * (1.0 + jnp.tanh(jnp.sqrt(2.0 / jnp.pi) * (z + 0.044715 * z ** 3)))

    shortcut = x
    xn = ln(x, ln1_s, ln1_b)
    q = (xn @ wq).reshape(B, T, num_heads, D).transpose(0, 2, 1, 3)
    k = (xn @ wk).reshape(B, T, num_heads, D).transpose(0, 2, 1, 3)
    v = (xn @ wv).reshape(B, T, num_heads, D).transpose(0, 2, 1, 3)
    s = jnp.einsum("bhtd,bhsd->bhts", q, k)
    mask = jnp.triu(jnp.ones((T, T), bool), k=1)
    s = jnp.where(mask, -jnp.inf, s)
    p = jax.nn.softmax(s / jnp.sqrt(jnp.float32(D)), axis=-1)
    ctx = jnp.einsum("bhts,bhsd->bhtd", p, v).transpose(0, 2, 1, 3).reshape(B, T, E)
    att = ctx @ wo + bo
    x1 = ln(att, lnA_s, lnA_b) + shortcut

    shortcut = x1
    xn2 = ln(x1, ln2_s, ln2_b)
    ff = gelu(xn2 @ w1 + b1) @ w2 + b2
    return ln(ff, lnB_s, lnB_b) + shortcut


if __name__ == "__main__":
    # cfg: emb_dim=32, context_length=8, n_heads=4, drop_rate=0.0, qkv_bias=False
    B, T, E, H = 2, 8, 32, 4
    H4 = 4 * E

    key = jax.random.PRNGKey(0)
    ks = jax.random.split(key, 17)

    def nrm(k, shape, scale=0.02):
        return scale * jax.random.normal(k, shape, jnp.float32)

    params = (
        1.0 + nrm(ks[0], (1, E)), nrm(ks[1], (1, E)),                # norm1
        nrm(ks[2], (E, E)), nrm(ks[3], (E, E)), nrm(ks[4], (E, E)),  # Wq Wk Wv
        nrm(ks[5], (E, E)), nrm(ks[6], (1, E)),                      # Wo, bo
        1.0 + nrm(ks[7], (1, E)), nrm(ks[8], (1, E)),                # dropout1 (LN)
        1.0 + nrm(ks[9], (1, E)), nrm(ks[10], (1, E)),               # norm2
        nrm(ks[11], (E, H4)), nrm(ks[12], (1, H4)),                  # W1, b1
        nrm(ks[13], (H4, E)), nrm(ks[14], (1, E)),                   # W2, b2
        1.0 + nrm(ks[15], (1, E)), jnp.zeros((1, E), jnp.float32),   # dropout2 (LN)
    )

    x = jax.random.normal(ks[16], (B, T, E), jnp.float32)

    ref = ref_block(x, params, H)

    # 1) Numerically faithful path: f32 MXU operands + exact reciprocal.
    out = transformer_block(x, params, H,
                            matmul_dtype=jnp.float32, approx_recip=False)
    out = jax.block_until_ready(out)
    assert out.shape == (B, T, E)
    assert jnp.allclose(out, ref, atol=2e-4, rtol=2e-4), (
        f"max abs diff {jnp.max(jnp.abs(out - ref))}")

    # 2) Production path (perf review): bf16 MXU operands + EUP approx
    #    reciprocal.  Coarse smoke-check only — tight validation is done above.
    out_fast = transformer_block(x, params, H,
                                 matmul_dtype=jnp.bfloat16, approx_recip=True)
    out_fast = jax.block_until_ready(out_fast)
    assert jnp.all(jnp.isfinite(out_fast))
    assert jnp.allclose(out_fast, ref, atol=1e-1, rtol=1e-1), (
        f"max abs diff (bf16 path) {jnp.max(jnp.abs(out_fast - ref))}")

    print("KERNEL_OK")
</pallas_src>

<mosaic_0001>
module attributes {stable_mosaic.version = 11 : i64} {
  func.func @transformer_block_kernel(%arg0: i32, %arg1: memref<1x8x32xf32, #tpu.memory_space<vmem>>, %arg2: memref<1x32xf32, #tpu.memory_space<vmem>>, %arg3: memref<1x32xf32, #tpu.memory_space<vmem>>, %arg4: memref<32x96xf32, #tpu.memory_space<vmem>>, %arg5: memref<32x32xf32, #tpu.memory_space<vmem>>, %arg6: memref<1x32xf32, #tpu.memory_space<vmem>>, %arg7: memref<1x32xf32, #tpu.memory_space<vmem>>, %arg8: memref<1x32xf32, #tpu.memory_space<vmem>>, %arg9: memref<1x32xf32, #tpu.memory_space<vmem>>, %arg10: memref<1x32xf32, #tpu.memory_space<vmem>>, %arg11: memref<32x128xf32, #tpu.memory_space<vmem>>, %arg12: memref<1x128xf32, #tpu.memory_space<vmem>>, %arg13: memref<128x32xf32, #tpu.memory_space<vmem>>, %arg14: memref<1x32xf32, #tpu.memory_space<vmem>>, %arg15: memref<1x32xf32, #tpu.memory_space<vmem>>, %arg16: memref<1x32xf32, #tpu.memory_space<vmem>>, %arg17: memref<1x8x32xf32, #tpu.memory_space<vmem>>, %arg18: memref<8x32xf32, #tpu.memory_space<vmem>>) attributes {dimension_semantics = [#tpu.dimension_semantics<parallel>], iteration_bounds = array<i64: 2>, scalar_prefetch = 0 : i64, scratch_operands = 1 : i64, tpu.core_type = #tpu.core_type<tc>, window_params = [{transform_indices = @transform_0, window_bounds = array<i64: 1, 8, 32>}, {pipeline_mode = #tpu.pipeline_mode<synchronous>, transform_indices = @transform_1, window_bounds = array<i64: 1, 32>}, {pipeline_mode = #tpu.pipeline_mode<synchronous>, transform_indices = @transform_2, window_bounds = array<i64: 1, 32>}, {pipeline_mode = #tpu.pipeline_mode<synchronous>, transform_indices = @transform_3, window_bounds = array<i64: 32, 96>}, {pipeline_mode = #tpu.pipeline_mode<synchronous>, transform_indices = @transform_4, window_bounds = array<i64: 32, 32>}, {pipeline_mode = #tpu.pipeline_mode<synchronous>, transform_indices = @transform_5, window_bounds = array<i64: 1, 32>}, {pipeline_mode = #tpu.pipeline_mode<synchronous>, transform_indices = @transform_6, window_bounds = array<i64: 1, 32>}, {pipeline_mode = #tpu.pipeline_mode<synchronous>, transform_indices = @transform_7, window_bounds = array<i64: 1, 32>}, {pipeline_mode = #tpu.pipeline_mode<synchronous>, transform_indices = @transform_8, window_bounds = array<i64: 1, 32>}, {pipeline_mode = #tpu.pipeline_mode<synchronous>, transform_indices = @transform_9, window_bounds = array<i64: 1, 32>}, {pipeline_mode = #tpu.pipeline_mode<synchronous>, transform_indices = @transform_10, window_bounds = array<i64: 32, 128>}, {pipeline_mode = #tpu.pipeline_mode<synchronous>, transform_indices = @transform_11, window_bounds = array<i64: 1, 128>}, {pipeline_mode = #tpu.pipeline_mode<synchronous>, transform_indices = @transform_12, window_bounds = array<i64: 128, 32>}, {pipeline_mode = #tpu.pipeline_mode<synchronous>, transform_indices = @transform_13, window_bounds = array<i64: 1, 32>}, {pipeline_mode = #tpu.pipeline_mode<synchronous>, transform_indices = @transform_14, window_bounds = array<i64: 1, 32>}, {pipeline_mode = #tpu.pipeline_mode<synchronous>, transform_indices = @transform_15, window_bounds = array<i64: 1, 32>}, {transform_indices = @transform_16, window_bounds = array<i64: 1, 8, 32>}]} {
    %c0 = arith.constant 0 : index
    %c0_0 = arith.constant 0 : index
    %c0_1 = arith.constant 0 : index
    %0 = vector.load %arg1[%c0, %c0_0, %c0_1] : memref<1x8x32xf32, #tpu.memory_space<vmem>>, vector<1x8x32xf32>
    %1 = vector.shape_cast %0 : vector<1x8x32xf32> to vector<8x32xf32>
    %c0_2 = arith.constant 0 : index
    %c0_3 = arith.constant 0 : index
    %2 = vector.load %arg2[%c0_2, %c0_3] : memref<1x32xf32, #tpu.memory_space<vmem>>, vector<1x32xf32>
    %c0_4 = arith.constant 0 : index
    %c0_5 = arith.constant 0 : index
    %3 = vector.load %arg3[%c0_4, %c0_5] : memref<1x32xf32, #tpu.memory_space<vmem>>, vector<1x32xf32>
    %cst = arith.constant dense<0.000000e+00> : vector<8xf32>
    %4 = vector.multi_reduction <add>, %1, %cst [1] : vector<8x32xf32> to vector<8xf32>
    %5 = vector.shape_cast %4 : vector<8xf32> to vector<8x1xf32>
    %cst_6 = arith.constant 3.200000e+01 : f32
    %6 = vector.broadcast %cst_6 : f32 to vector<8x1xf32>
    %7 = arith.divf %5, %6 : vector<8x1xf32>
    %8 = arith.mulf %1, %1 : vector<8x32xf32>
    %cst_7 = arith.constant dense<0.000000e+00> : vector<8xf32>
    %9 = vector.multi_reduction <add>, %8, %cst_7 [1] : vector<8x32xf32> to vector<8xf32>
    %10 = vector.shape_cast %9 : vector<8xf32> to vector<8x1xf32>
    %cst_8 = arith.constant 3.200000e+01 : f32
    %11 = vector.broadcast %cst_8 : f32 to vector<8x1xf32>
    %12 = arith.divf %10, %11 : vector<8x1xf32>
    %13 = arith.mulf %7, %7 : vector<8x1xf32>
    %14 = arith.subf %12, %13 : vector<8x1xf32>
    %cst_9 = arith.constant 9.99999974E-6 : f32
    %15 = vector.broadcast %cst_9 : f32 to vector<8x1xf32>
    %16 = arith.addf %14, %15 : vector<8x1xf32>
    %17 = math.rsqrt %16 : vector<8x1xf32>
    %18 = vector.broadcast %7 : vector<8x1xf32> to vector<8x32xf32>
    %19 = arith.subf %1, %18 : vector<8x32xf32>
    %20 = vector.broadcast %17 : vector<8x1xf32> to vector<8x32xf32>
    %21 = arith.mulf %19, %20 : vector<8x32xf32>
    %22 = vector.broadcast %2 : vector<1x32xf32> to vector<8x32xf32>
    %23 = arith.mulf %22, %21 : vector<8x32xf32>
    %24 = vector.broadcast %3 : vector<1x32xf32> to vector<8x32xf32>
    %25 = arith.addf %23, %24 : vector<8x32xf32>
    %c0_10 = arith.constant 0 : index
    %c0_11 = arith.constant 0 : index
    %26 = vector.load %arg4[%c0_10, %c0_11] : memref<32x96xf32, #tpu.memory_space<vmem>>, vector<32x96xf32>
    %cst_12 = arith.constant dense<0.000000e+00> : vector<8x96xf32>
    %27 = tpu.matmul %25, %26, %cst_12 {dimension_numbers = #tpu.dot_dimension_numbers<[1], [0], [0], [1], [0, 0, 1, 1], [], []>} : vector<8x32xf32>, vector<32x96xf32>, vector<8x96xf32> -> vector<8x96xf32>
    %cst_13 = arith.constant 8.000000e+00 : f32
    %28 = math.sqrt %cst_13 : f32
    %cst_14 = arith.constant 1.000000e+00 : f32
    %29 = arith.divf %cst_14, %28 : f32
    %30 = vector.extract_strided_slice %27 {offsets = [0, 0], sizes = [8, 32], strides = [1, 1]} : vector<8x96xf32> to vector<8x32xf32>
    %31 = vector.broadcast %29 : f32 to vector<8x32xf32>
    %32 = arith.mulf %30, %31 : vector<8x32xf32>
    %33 = vector.shape_cast %32 : vector<8x32xf32> to vector<1x8x32xf32>
    %34 = vector.extract_strided_slice %27 {offsets = [0, 32], sizes = [8, 32], strides = [1, 1]} : vector<8x96xf32> to vector<8x32xf32>
    %35 = vector.shape_cast %34 : vector<8x32xf32> to vector<1x8x32xf32>
    %36 = vector.extract_strided_slice %27 {offsets = [0, 64], sizes = [8, 32], strides = [1, 1]} : vector<8x96xf32> to vector<8x32xf32>
    %37 = vector.shape_cast %36 : vector<8x32xf32> to vector<1x8x32xf32>
    %38 = tpu.iota {dimensions = array<i32: 0>} : vector<8x8xi32>
    %39 = tpu.iota {dimensions = array<i32: 1>} : vector<8x8xi32>
    %40 = arith.cmpi sgt, %39, %38 : vector<8x8xi32>
    %41 = vector.extract_strided_slice %33 {offsets = [0, 0, 0], sizes = [1, 8, 8], strides = [1, 1, 1]} : vector<1x8x32xf32> to vector<1x8x8xf32>
    %42 = vector.extract_strided_slice %35 {offsets = [0, 0, 0], sizes = [1, 8, 8], strides = [1, 1, 1]} : vector<1x8x32xf32> to vector<1x8x8xf32>
    %43 = vector.extract_strided_slice %37 {offsets = [0, 0, 0], sizes = [1, 8, 8], strides = [1, 1, 1]} : vector<1x8x32xf32> to vector<1x8x8xf32>
    "tpu.trace_start"() <{level = 10 : i32, message = "btd,bsd->bts"}> : () -> ()
    %cst_15 = arith.constant dense<0.000000e+00> : vector<1x8x8xf32>
    %44 = tpu.matmul %41, %42, %cst_15 {dimension_numbers = #tpu.dot_dimension_numbers<[2], [2], [1], [1], [0, 0, 0, 1, 1, 1], [0], [0]>} : vector<1x8x8xf32>, vector<1x8x8xf32>, vector<1x8x8xf32> -> vector<1x8x8xf32>
    %cst_16 = arith.constant -1.000000e+30 : f32
    "tpu.trace_stop"() : () -> ()
    %45 = vector.shape_cast %40 : vector<8x8xi1> to vector<1x8x8xi1>
    %46 = vector.broadcast %cst_16 : f32 to vector<1x8x8xf32>
    %47 = arith.select %45, %46, %44 : vector<1x8x8xi1>, vector<1x8x8xf32>
    %cst_17 = arith.constant dense<0xFF800000> : vector<1x8xf32>
    %48 = vector.multi_reduction <maximumf>, %47, %cst_17 [2] : vector<1x8x8xf32> to vector<1x8xf32>
    %49 = vector.shape_cast %48 : vector<1x8xf32> to vector<1x8x1xf32>
    %50 = vector.broadcast %49 : vector<1x8x1xf32> to vector<1x8x8xf32>
    %51 = arith.subf %47, %50 : vector<1x8x8xf32>
    %52 = math.exp %51 : vector<1x8x8xf32>
    %cst_18 = arith.constant dense<0.000000e+00> : vector<1x8xf32>
    %53 = vector.multi_reduction <add>, %52, %cst_18 [2] : vector<1x8x8xf32> to vector<1x8xf32>
    %54 = vector.shape_cast %53 : vector<1x8xf32> to vector<1x8x1xf32>
    %55 = tpu.reciprocal %54 : vector<1x8x1xf32> -> vector<1x8x1xf32>
    %56 = vector.broadcast %55 : vector<1x8x1xf32> to vector<1x8x8xf32>
    %57 = arith.mulf %52, %56 : vector<1x8x8xf32>
    "tpu.trace_start"() <{level = 10 : i32, message = "bts,bsd->btd"}> : () -> ()
    %cst_19 = arith.constant dense<0.000000e+00> : vector<1x8x8xf32>
    %58 = tpu.matmul %57, %43, %cst_19 {dimension_numbers = #tpu.dot_dimension_numbers<[2], [1], [1], [2], [0, 0, 0, 1, 1, 2], [0], [0]>} : vector<1x8x8xf32>, vector<1x8x8xf32>, vector<1x8x8xf32> -> vector<1x8x8xf32>
    "tpu.trace_stop"() : () -> ()
    %59 = vector.shape_cast %58 : vector<1x8x8xf32> to vector<8x8xf32>
    %c0_20 = arith.constant 0 : index
    %c0_21 = arith.constant 0 : index
    %60 = vector.load %arg18[%c0_20, %c0_21] : memref<8x32xf32, #tpu.memory_space<vmem>>, vector<8x8xf32>
    tpu.vector_store %arg18[%c0_20, %c0_21], %59 {strides = array<i32>} : memref<8x32xf32, #tpu.memory_space<vmem>>, vector<8x8xf32>,
    %61 = vector.extract_strided_slice %33 {offsets = [0, 0, 8], sizes = [1, 8, 8], strides = [1, 1, 1]} : vector<1x8x32xf32> to vector<1x8x8xf32>
    %62 = vector.extract_strided_slice %35 {offsets = [0, 0, 8], sizes = [1, 8, 8], strides = [1, 1, 1]} : vector<1x8x32xf32> to vector<1x8x8xf32>
    %63 = vector.extract_strided_slice %37 {offsets = [0, 0, 8], sizes = [1, 8, 8], strides = [1, 1, 1]} : vector<1x8x32xf32> to vector<1x8x8xf32>
    "tpu.trace_start"() <{level = 10 : i32, message = "btd,bsd->bts"}> : () -> ()
    %cst_22 = arith.constant dense<0.000000e+00> : vector<1x8x8xf32>
    %64 = tpu.matmul %61, %62, %cst_22 {dimension_numbers = #tpu.dot_dimension_numbers<[2], [2], [1], [1], [0, 0, 0, 1, 1, 1], [0], [0]>} : vector<1x8x8xf32>, vector<1x8x8xf32>, vector<1x8x8xf32> -> vector<1x8x8xf32>
    %cst_23 = arith.constant -1.000000e+30 : f32
    "tpu.trace_stop"() : () -> ()
    %65 = vector.shape_cast %40 : vector<8x8xi1> to vector<1x8x8xi1>
    %66 = vector.broadcast %cst_23 : f32 to vector<1x8x8xf32>
    %67 = arith.select %65, %66, %64 : vector<1x8x8xi1>, vector<1x8x8xf32>
    %cst_24 = arith.constant dense<0xFF800000> : vector<1x8xf32>
    %68 = vector.multi_reduction <maximumf>, %67, %cst_24 [2] : vector<1x8x8xf32> to vector<1x8xf32>
    %69 = vector.shape_cast %68 : vector<1x8xf32> to vector<1x8x1xf32>
    %70 = vector.broadcast %69 : vector<1x8x1xf32> to vector<1x8x8xf32>
    %71 = arith.subf %67, %70 : vector<1x8x8xf32>
    %72 = math.exp %71 : vector<1x8x8xf32>
    %cst_25 = arith.constant dense<0.000000e+00> : vector<1x8xf32>
    %73 = vector.multi_reduction <add>, %72, %cst_25 [2] : vector<1x8x8xf32> to vector<1x8xf32>
    %74 = vector.shape_cast %73 : vector<1x8xf32> to vector<1x8x1xf32>
    %75 = tpu.reciprocal %74 : vector<1x8x1xf32> -> vector<1x8x1xf32>
    %76 = vector.broadcast %75 : vector<1x8x1xf32> to vector<1x8x8xf32>
    %77 = arith.mulf %72, %76 : vector<1x8x8xf32>
    "tpu.trace_start"() <{level = 10 : i32, message = "bts,bsd->btd"}> : () -> ()
    %cst_26 = arith.constant dense<0.000000e+00> : vector<1x8x8xf32>
    %78 = tpu.matmul %77, %63, %cst_26 {dimension_numbers = #tpu.dot_dimension_numbers<[2], [1], [1], [2], [0, 0, 0, 1, 1, 2], [0], [0]>} : vector<1x8x8xf32>, vector<1x8x8xf32>, vector<1x8x8xf32> -> vector<1x8x8xf32>
    "tpu.trace_stop"() : () -> ()
    %79 = vector.shape_cast %78 : vector<1x8x8xf32> to vector<8x8xf32>
    %c0_27 = arith.constant 0 : index
    %c8 = arith.constant 8 : index
    %80 = vector.load %arg18[%c0_27, %c8] : memref<8x32xf32, #tpu.memory_space<vmem>>, vector<8x8xf32>
    tpu.vector_store %arg18[%c0_27, %c8], %79 {strides = array<i32>} : memref<8x32xf32, #tpu.memory_space<vmem>>, vector<8x8xf32>,
    %81 = vector.extract_strided_slice %33 {offsets = [0, 0, 16], sizes = [1, 8, 8], strides = [1, 1, 1]} : vector<1x8x32xf32> to vector<1x8x8xf32>
    %82 = vector.extract_strided_slice %35 {offsets = [0, 0, 16], sizes = [1, 8, 8], strides = [1, 1, 1]} : vector<1x8x32xf32> to vector<1x8x8xf32>
    %83 = vector.extract_strided_slice %37 {offsets = [0, 0, 16], sizes = [1, 8, 8], strides = [1, 1, 1]} : vector<1x8x32xf32> to vector<1x8x8xf32>
    "tpu.trace_start"() <{level = 10 : i32, message = "btd,bsd->bts"}> : () -> ()
    %cst_28 = arith.constant dense<0.000000e+00> : vector<1x8x8xf32>
    %84 = tpu.matmul %81, %82, %cst_28 {dimension_numbers = #tpu.dot_dimension_numbers<[2], [2], [1], [1], [0, 0, 0, 1, 1, 1], [0], [0]>} : vector<1x8x8xf32>, vector<1x8x8xf32>, vector<1x8x8xf32> -> vector<1x8x8xf32>
    %cst_29 = arith.constant -1.000000e+30 : f32
    "tpu.trace_stop"() : () -> ()
    %85 = vector.shape_cast %40 : vector<8x8xi1> to vector<1x8x8xi1>
    %86 = vector.broadcast %cst_29 : f32 to vector<1x8x8xf32>
    %87 = arith.select %85, %86, %84 : vector<1x8x8xi1>, vector<1x8x8xf32>
    %cst_30 = arith.constant dense<0xFF800000> : vector<1x8xf32>
    %88 = vector.multi_reduction <maximumf>, %87, %cst_30 [2] : vector<1x8x8xf32> to vector<1x8xf32>
    %89 = vector.shape_cast %88 : vector<1x8xf32> to vector<1x8x1xf32>
    %90 = vector.broadcast %89 : vector<1x8x1xf32> to vector<1x8x8xf32>
    %91 = arith.subf %87, %90 : vector<1x8x8xf32>
    %92 = math.exp %91 : vector<1x8x8xf32>
    %cst_31 = arith.constant dense<0.000000e+00> : vector<1x8xf32>
    %93 = vector.multi_reduction <add>, %92, %cst_31 [2] : vector<1x8x8xf32> to vector<1x8xf32>
    %94 = vector.shape_cast %93 : vector<1x8xf32> to vector<1x8x1xf32>
    %95 = tpu.reciprocal %94 : vector<1x8x1xf32> -> vector<1x8x1xf32>
    %96 = vector.broadcast %95 : vector<1x8x1xf32> to vector<1x8x8xf32>
    %97 = arith.mulf %92, %96 : vector<1x8x8xf32>
    "tpu.trace_start"() <{level = 10 : i32, message = "bts,bsd->btd"}> : () -> ()
    %cst_32 = arith.constant dense<0.000000e+00> : vector<1x8x8xf32>
    %98 = tpu.matmul %97, %83, %cst_32 {dimension_numbers = #tpu.dot_dimension_numbers<[2], [1], [1], [2], [0, 0, 0, 1, 1, 2], [0], [0]>} : vector<1x8x8xf32>, vector<1x8x8xf32>, vector<1x8x8xf32> -> vector<1x8x8xf32>
    "tpu.trace_stop"() : () -> ()
    %99 = vector.shape_cast %98 : vector<1x8x8xf32> to vector<8x8xf32>
    %c0_33 = arith.constant 0 : index
    %c16 = arith.constant 16 : index
    %100 = vector.load %arg18[%c0_33, %c16] : memref<8x32xf32, #tpu.memory_space<vmem>>, vector<8x8xf32>
    tpu.vector_store %arg18[%c0_33, %c16], %99 {strides = array<i32>} : memref<8x32xf32, #tpu.memory_space<vmem>>, vector<8x8xf32>,
    %101 = vector.extract_strided_slice %33 {offsets = [0, 0, 24], sizes = [1, 8, 8], strides = [1, 1, 1]} : vector<1x8x32xf32> to vector<1x8x8xf32>
    %102 = vector.extract_strided_slice %35 {offsets = [0, 0, 24], sizes = [1, 8, 8], strides = [1, 1, 1]} : vector<1x8x32xf32> to vector<1x8x8xf32>
    %103 = vector.extract_strided_slice %37 {offsets = [0, 0, 24], sizes = [1, 8, 8], strides = [1, 1, 1]} : vector<1x8x32xf32> to vector<1x8x8xf32>
    "tpu.trace_start"() <{level = 10 : i32, message = "btd,bsd->bts"}> : () -> ()
    %cst_34 = arith.constant dense<0.000000e+00> : vector<1x8x8xf32>
    %104 = tpu.matmul %101, %102, %cst_34 {dimension_numbers = #tpu.dot_dimension_numbers<[2], [2], [1], [1], [0, 0, 0, 1, 1, 1], [0], [0]>} : vector<1x8x8xf32>, vector<1x8x8xf32>, vector<1x8x8xf32> -> vector<1x8x8xf32>
    %cst_35 = arith.constant -1.000000e+30 : f32
    "tpu.trace_stop"() : () -> ()
    %105 = vector.shape_cast %40 : vector<8x8xi1> to vector<1x8x8xi1>
    %106 = vector.broadcast %cst_35 : f32 to vector<1x8x8xf32>
    %107 = arith.select %105, %106, %104 : vector<1x8x8xi1>, vector<1x8x8xf32>
    %cst_36 = arith.constant dense<0xFF800000> : vector<1x8xf32>
    %108 = vector.multi_reduction <maximumf>, %107, %cst_36 [2] : vector<1x8x8xf32> to vector<1x8xf32>
    %109 = vector.shape_cast %108 : vector<1x8xf32> to vector<1x8x1xf32>
    %110 = vector.broadcast %109 : vector<1x8x1xf32> to vector<1x8x8xf32>
    %111 = arith.subf %107, %110 : vector<1x8x8xf32>
    %112 = math.exp %111 : vector<1x8x8xf32>
    %cst_37 = arith.constant dense<0.000000e+00> : vector<1x8xf32>
    %113 = vector.multi_reduction <add>, %112, %cst_37 [2] : vector<1x8x8xf32> to vector<1x8xf32>
    %114 = vector.shape_cast %113 : vector<1x8xf32> to vector<1x8x1xf32>
    %115 = tpu.reciprocal %114 : vector<1x8x1xf32> -> vector<1x8x1xf32>
    %116 = vector.broadcast %115 : vector<1x8x1xf32> to vector<1x8x8xf32>
    %117 = arith.mulf %112, %116 : vector<1x8x8xf32>
    "tpu.trace_start"() <{level = 10 : i32, message = "bts,bsd->btd"}> : () -> ()
    %cst_38 = arith.constant dense<0.000000e+00> : vector<1x8x8xf32>
    %118 = tpu.matmul %117, %103, %cst_38 {dimension_numbers = #tpu.dot_dimension_numbers<[2], [1], [1], [2], [0, 0, 0, 1, 1, 2], [0], [0]>} : vector<1x8x8xf32>, vector<1x8x8xf32>, vector<1x8x8xf32> -> vector<1x8x8xf32>
    "tpu.trace_stop"() : () -> ()
    %119 = vector.shape_cast %118 : vector<1x8x8xf32> to vector<8x8xf32>
    %c0_39 = arith.constant 0 : index
    %c24 = arith.constant 24 : index
    %120 = vector.load %arg18[%c0_39, %c24] : memref<8x32xf32, #tpu.memory_space<vmem>>, vector<8x8xf32>
    tpu.vector_store %arg18[%c0_39, %c24], %119 {strides = array<i32>} : memref<8x32xf32, #tpu.memory_space<vmem>>, vector<8x8xf32>,
    %c0_40 = arith.constant 0 : index
    %c0_41 = arith.constant 0 : index
    %121 = vector.load %arg18[%c0_40, %c0_41] : memref<8x32xf32, #tpu.memory_space<vmem>>, vector<8x32xf32>
    %c0_42 = arith.constant 0 : index
    %c0_43 = arith.constant 0 : index
    %122 = vector.load %arg5[%c0_42, %c0_43] : memref<32x32xf32, #tpu.memory_space<vmem>>, vector<32x32xf32>
    %cst_44 = arith.constant dense<0.000000e+00> : vector<8x32xf32>
    %123 = tpu.matmul %121, %122, %cst_44 {dimension_numbers = #tpu.dot_dimension_numbers<[1], [0], [0], [1], [0, 0, 1, 1], [], []>} : vector<8x32xf32>, vector<32x32xf32>, vector<8x32xf32> -> vector<8x32xf32>
    %c0_45 = arith.constant 0 : index
    %c0_46 = arith.constant 0 : index
    %124 = vector.load %arg6[%c0_45, %c0_46] : memref<1x32xf32, #tpu.memory_space<vmem>>, vector<1x32xf32>
    %125 = vector.broadcast %124 : vector<1x32xf32> to vector<8x32xf32>
    %126 = arith.addf %123, %125 : vector<8x32xf32>
    %c0_47 = arith.constant 0 : index
    %c0_48 = arith.constant 0 : index
    %127 = vector.load %arg7[%c0_47, %c0_48] : memref<1x32xf32, #tpu.memory_space<vmem>>, vector<1x32xf32>
    %c0_49 = arith.constant 0 : index
    %c0_50 = arith.constant 0 : index
    %128 = vector.load %arg8[%c0_49, %c0_50] : memref<1x32xf32, #tpu.memory_space<vmem>>, vector<1x32xf32>
    %cst_51 = arith.constant dense<0.000000e+00> : vector<8xf32>
    %129 = vector.multi_reduction <add>, %126, %cst_51 [1] : vector<8x32xf32> to vector<8xf32>
    %130 = vector.shape_cast %129 : vector<8xf32> to vector<8x1xf32>
    %cst_52 = arith.constant 3.200000e+01 : f32
    %131 = vector.broadcast %cst_52 : f32 to vector<8x1xf32>
    %132 = arith.divf %130, %131 : vector<8x1xf32>
    %133 = arith.mulf %126, %126 : vector<8x32xf32>
    %cst_53 = arith.constant dense<0.000000e+00> : vector<8xf32>
    %134 = vector.multi_reduction <add>, %133, %cst_53 [1] : vector<8x32xf32> to vector<8xf32>
    %135 = vector.shape_cast %134 : vector<8xf32> to vector<8x1xf32>
    %cst_54 = arith.constant 3.200000e+01 : f32
    %136 = vector.broadcast %cst_54 : f32 to vector<8x1xf32>
    %137 = arith.divf %135, %136 : vector<8x1xf32>
    %138 = arith.mulf %132, %132 : vector<8x1xf32>
    %139 = arith.subf %137, %138 : vector<8x1xf32>
    %cst_55 = arith.constant 9.99999974E-6 : f32
    %140 = vector.broadcast %cst_55 : f32 to vector<8x1xf32>
    %141 = arith.addf %139, %140 : vector<8x1xf32>
    %142 = math.rsqrt %141 : vector<8x1xf32>
    %143 = vector.broadcast %132 : vector<8x1xf32> to vector<8x32xf32>
    %144 = arith.subf %126, %143 : vector<8x32xf32>
    %145 = vector.broadcast %142 : vector<8x1xf32> to vector<8x32xf32>
    %146 = arith.mulf %144, %145 : vector<8x32xf32>
    %147 = vector.broadcast %127 : vector<1x32xf32> to vector<8x32xf32>
    %148 = arith.mulf %147, %146 : vector<8x32xf32>
    %149 = vector.broadcast %128 : vector<1x32xf32> to vector<8x32xf32>
    %150 = arith.addf %148, %149 : vector<8x32xf32>
    %151 = arith.addf %150, %1 : vector<8x32xf32>
    %c0_56 = arith.constant 0 : index
    %c0_57 = arith.constant 0 : index
    %152 = vector.load %arg9[%c0_56, %c0_57] : memref<1x32xf32, #tpu.memory_space<vmem>>, vector<1x32xf32>
    %c0_58 = arith.constant 0 : index
    %c0_59 = arith.constant 0 : index
    %153 = vector.load %arg10[%c0_58, %c0_59] : memref<1x32xf32, #tpu.memory_space<vmem>>, vector<1x32xf32>
    %cst_60 = arith.constant dense<0.000000e+00> : vector<8xf32>
    %154 = vector.multi_reduction <add>, %151, %cst_60 [1] : vector<8x32xf32> to vector<8xf32>
    %155 = vector.shape_cast %154 : vector<8xf32> to vector<8x1xf32>
    %cst_61 = arith.constant 3.200000e+01 : f32
    %156 = vector.broadcast %cst_61 : f32 to vector<8x1xf32>
    %157 = arith.divf %155, %156 : vector<8x1xf32>
    %158 = arith.mulf %151, %151 : vector<8x32xf32>
    %cst_62 = arith.constant dense<0.000000e+00> : vector<8xf32>
    %159 = vector.multi_reduction <add>, %158, %cst_62 [1] : vector<8x32xf32> to vector<8xf32>
    %160 = vector.shape_cast %159 : vector<8xf32> to vector<8x1xf32>
    %cst_63 = arith.constant 3.200000e+01 : f32
    %161 = vector.broadcast %cst_63 : f32 to vector<8x1xf32>
    %162 = arith.divf %160, %161 : vector<8x1xf32>
    %163 = arith.mulf %157, %157 : vector<8x1xf32>
    %164 = arith.subf %162, %163 : vector<8x1xf32>
    %cst_64 = arith.constant 9.99999974E-6 : f32
    %165 = vector.broadcast %cst_64 : f32 to vector<8x1xf32>
    %166 = arith.addf %164, %165 : vector<8x1xf32>
    %167 = math.rsqrt %166 : vector<8x1xf32>
    %168 = vector.broadcast %157 : vector<8x1xf32> to vector<8x32xf32>
    %169 = arith.subf %151, %168 : vector<8x32xf32>
    %170 = vector.broadcast %167 : vector<8x1xf32> to vector<8x32xf32>
    %171 = arith.mulf %169, %170 : vector<8x32xf32>
    %172 = vector.broadcast %152 : vector<1x32xf32> to vector<8x32xf32>
    %173 = arith.mulf %172, %171 : vector<8x32xf32>
    %174 = vector.broadcast %153 : vector<1x32xf32> to vector<8x32xf32>
    %175 = arith.addf %173, %174 : vector<8x32xf32>
    %c0_65 = arith.constant 0 : index
    %c0_66 = arith.constant 0 : index
    %176 = vector.load %arg11[%c0_65, %c0_66] : memref<32x128xf32, #tpu.memory_space<vmem>>, vector<32x128xf32>
    %cst_67 = arith.constant dense<0.000000e+00> : vector<8x128xf32>
    %177 = tpu.matmul %175, %176, %cst_67 {dimension_numbers = #tpu.dot_dimension_numbers<[1], [0], [0], [1], [0, 0, 1, 1], [], []>} : vector<8x32xf32>, vector<32x128xf32>, vector<8x128xf32> -> vector<8x128xf32>
    %c0_68 = arith.constant 0 : index
    %c0_69 = arith.constant 0 : index
    %178 = vector.load %arg12[%c0_68, %c0_69] : memref<1x128xf32, #tpu.memory_space<vmem>>, vector<1x128xf32>
    %179 = vector.broadcast %178 : vector<1x128xf32> to vector<8x128xf32>
    %180 = arith.addf %177, %179 : vector<8x128xf32>
    %cst_70 = arith.constant 0.636619746 : f32
    %181 = math.sqrt %cst_70 : f32
    %cst_71 = arith.constant 5.000000e-01 : f32
    %182 = vector.broadcast %cst_71 : f32 to vector<8x128xf32>
    %183 = arith.mulf %182, %180 : vector<8x128xf32>
    %cst_72 = arith.constant 4.471500e-02 : f32
    %184 = vector.broadcast %cst_72 : f32 to vector<8x128xf32>
    %185 = arith.mulf %184, %180 : vector<8x128xf32>
    %186 = arith.mulf %185, %180 : vector<8x128xf32>
    %187 = arith.mulf %186, %180 : vector<8x128xf32>
    %188 = arith.addf %180, %187 : vector<8x128xf32>
    %189 = vector.broadcast %181 : f32 to vector<8x128xf32>
    %190 = arith.mulf %189, %188 : vector<8x128xf32>
    %191 = math.tanh %190 : vector<8x128xf32>
    %cst_73 = arith.constant 1.000000e+00 : f32
    %192 = vector.broadcast %cst_73 : f32 to vector<8x128xf32>
    %193 = arith.addf %192, %191 : vector<8x128xf32>
    %194 = arith.mulf %183, %193 : vector<8x128xf32>
    %c0_74 = arith.constant 0 : index
    %c0_75 = arith.constant 0 : index
    %195 = vector.load %arg13[%c0_74, %c0_75] : memref<128x32xf32, #tpu.memory_space<vmem>>, vector<128x32xf32>
    %cst_76 = arith.constant dense<0.000000e+00> : vector<8x32xf32>
    %196 = tpu.matmul %194, %195, %cst_76 {dimension_numbers = #tpu.dot_dimension_numbers<[1], [0], [0], [1], [0, 0, 1, 1], [], []>} : vector<8x128xf32>, vector<128x32xf32>, vector<8x32xf32> -> vector<8x32xf32>
    %c0_77 = arith.constant 0 : index
    %c0_78 = arith.constant 0 : index
    %197 = vector.load %arg14[%c0_77, %c0_78] : memref<1x32xf32, #tpu.memory_space<vmem>>, vector<1x32xf32>
    %198 = vector.broadcast %197 : vector<1x32xf32> to vector<8x32xf32>
    %199 = arith.addf %196, %198 : vector<8x32xf32>
    %c0_79 = arith.constant 0 : index
    %c0_80 = arith.constant 0 : index
    %200 = vector.load %arg15[%c0_79, %c0_80] : memref<1x32xf32, #tpu.memory_space<vmem>>, vector<1x32xf32>
    %c0_81 = arith.constant 0 : index
    %c0_82 = arith.constant 0 : index
    %201 = vector.load %arg16[%c0_81, %c0_82] : memref<1x32xf32, #tpu.memory_space<vmem>>, vector<1x32xf32>
    %cst_83 = arith.constant dense<0.000000e+00> : vector<8xf32>
    %202 = vector.multi_reduction <add>, %199, %cst_83 [1] : vector<8x32xf32> to vector<8xf32>
    %203 = vector.shape_cast %202 : vector<8xf32> to vector<8x1xf32>
    %cst_84 = arith.constant 3.200000e+01 : f32
    %204 = vector.broadcast %cst_84 : f32 to vector<8x1xf32>
    %205 = arith.divf %203, %204 : vector<8x1xf32>
    %206 = arith.mulf %199, %199 : vector<8x32xf32>
    %cst_85 = arith.constant dense<0.000000e+00> : vector<8xf32>
    %207 = vector.multi_reduction <add>, %206, %cst_85 [1] : vector<8x32xf32> to vector<8xf32>
    %208 = vector.shape_cast %207 : vector<8xf32> to vector<8x1xf32>
    %cst_86 = arith.constant 3.200000e+01 : f32
    %209 = vector.broadcast %cst_86 : f32 to vector<8x1xf32>
    %210 = arith.divf %208, %209 : vector<8x1xf32>
    %211 = arith.mulf %205, %205 : vector<8x1xf32>
    %212 = arith.subf %210, %211 : vector<8x1xf32>
    %cst_87 = arith.constant 9.99999974E-6 : f32
    %213 = vector.broadcast %cst_87 : f32 to vector<8x1xf32>
    %214 = arith.addf %212, %213 : vector<8x1xf32>
    %215 = math.rsqrt %214 : vector<8x1xf32>
    %216 = vector.broadcast %205 : vector<8x1xf32> to vector<8x32xf32>
    %217 = arith.subf %199, %216 : vector<8x32xf32>
    %218 = vector.broadcast %215 : vector<8x1xf32> to vector<8x32xf32>
    %219 = arith.mulf %217, %218 : vector<8x32xf32>
    %220 = vector.broadcast %200 : vector<1x32xf32> to vector<8x32xf32>
    %221 = arith.mulf %220, %219 : vector<8x32xf32>
    %222 = vector.broadcast %201 : vector<1x32xf32> to vector<8x32xf32>
    %223 = arith.addf %221, %222 : vector<8x32xf32>
    %224 = arith.addf %223, %151 : vector<8x32xf32>
    %225 = vector.shape_cast %224 : vector<8x32xf32> to vector<1x8x32xf32>
    %c0_88 = arith.constant 0 : index
    %c0_89 = arith.constant 0 : index
    %c0_90 = arith.constant 0 : index
    %226 = vector.load %arg17[%c0_88, %c0_89, %c0_90] : memref<1x8x32xf32, #tpu.memory_space<vmem>>, vector<1x8x32xf32>
    tpu.vector_store %arg17[%c0_88, %c0_89, %c0_90], %225 {strides = array<i32>} : memref<1x8x32xf32, #tpu.memory_space<vmem>>, vector<1x8x32xf32>,
    return
  }
  func.func @transform_0(%arg0: i32) -> (i32, i32, i32) {
    %c0_i32 = arith.constant 0 : i32
    %c0_i32_0 = arith.constant 0 : i32
    %c0_i32_1 = arith.constant 0 : i32
    return %arg0, %c0_i32, %c0_i32_0 : i32, i32, i32
  }
  func.func @transform_1(%arg0: i32) -> (i32, i32) {
    %c0_i32 = arith.constant 0 : i32
    %c0_i32_0 = arith.constant 0 : i32
    %c0_i32_1 = arith.constant 0 : i32
    return %c0_i32, %c0_i32_0 : i32, i32
  }
  func.func @transform_2(%arg0: i32) -> (i32, i32) {
    %c0_i32 = arith.constant 0 : i32
    %c0_i32_0 = arith.constant 0 : i32
    %c0_i32_1 = arith.constant 0 : i32
    return %c0_i32, %c0_i32_0 : i32, i32
  }
  func.func @transform_3(%arg0: i32) -> (i32, i32) {
    %c0_i32 = arith.constant 0 : i32
    %c0_i32_0 = arith.constant 0 : i32
    %c0_i32_1 = arith.constant 0 : i32
    return %c0_i32, %c0_i32_0 : i32, i32
  }
  func.func @transform_4(%arg0: i32) -> (i32, i32) {
    %c0_i32 = arith.constant 0 : i32
    %c0_i32_0 = arith.constant 0 : i32
    %c0_i32_1 = arith.constant 0 : i32
    return %c0_i32, %c0_i32_0 : i32, i32
  }
  func.func @transform_5(%arg0: i32) -> (i32, i32) {
    %c0_i32 = arith.constant 0 : i32
    %c0_i32_0 = arith.constant 0 : i32
    %c0_i32_1 = arith.constant 0 : i32
    return %c0_i32, %c0_i32_0 : i32, i32
  }
  func.func @transform_6(%arg0: i32) -> (i32, i32) {
    %c0_i32 = arith.constant 0 : i32
    %c0_i32_0 = arith.constant 0 : i32
    %c0_i32_1 = arith.constant 0 : i32
    return %c0_i32, %c0_i32_0 : i32, i32
  }
  func.func @transform_7(%arg0: i32) -> (i32, i32) {
    %c0_i32 = arith.constant 0 : i32
    %c0_i32_0 = arith.constant 0 : i32
    %c0_i32_1 = arith.constant 0 : i32
    return %c0_i32, %c0_i32_0 : i32, i32
  }
  func.func @transform_8(%arg0: i32) -> (i32, i32) {
    %c0_i32 = arith.constant 0 : i32
    %c0_i32_0 = arith.constant 0 : i32
    %c0_i32_1 = arith.constant 0 : i32
    return %c0_i32, %c0_i32_0 : i32, i32
  }
  func.func @transform_9(%arg0: i32) -> (i32, i32) {
    %c0_i32 = arith.constant 0 : i32
    %c0_i32_0 = arith.constant 0 : i32
    %c0_i32_1 = arith.constant 0 : i32
    return %c0_i32, %c0_i32_0 : i32, i32
  }
  func.func @transform_10(%arg0: i32) -> (i32, i32) {
    %c0_i32 = arith.constant 0 : i32
    %c0_i32_0 = arith.constant 0 : i32
    %c0_i32_1 = arith.constant 0 : i32
    return %c0_i32, %c0_i32_0 : i32, i32
  }
  func.func @transform_11(%arg0: i32) -> (i32, i32) {
    %c0_i32 = arith.constant 0 : i32
    %c0_i32_0 = arith.constant 0 : i32
    %c0_i32_1 = arith.constant 0 : i32
    return %c0_i32, %c0_i32_0 : i32, i32
  }
  func.func @transform_12(%arg0: i32) -> (i32, i32) {
    %c0_i32 = arith.constant 0 : i32
    %c0_i32_0 = arith.constant 0 : i32
    %c0_i32_1 = arith.constant 0 : i32
    return %c0_i32, %c0_i32_0 : i32, i32
  }
  func.func @transform_13(%arg0: i32) -> (i32, i32) {
    %c0_i32 = arith.constant 0 : i32
    %c0_i32_0 = arith.constant 0 : i32
    %c0_i32_1 = arith.constant 0 : i32
    return %c0_i32, %c0_i32_0 : i32, i32
  }
  func.func @transform_14(%arg0: i32) -> (i32, i32) {
    %c0_i32 = arith.constant 0 : i32
    %c0_i32_0 = arith.constant 0 : i32
    %c0_i32_1 = arith.constant 0 : i32
    return %c0_i32, %c0_i32_0 : i32, i32
  }
  func.func @transform_15(%arg0: i32) -> (i32, i32) {
    %c0_i32 = arith.constant 0 : i32
    %c0_i32_0 = arith.constant 0 : i32
    %c0_i32_1 = arith.constant 0 : i32
    return %c0_i32, %c0_i32_0 : i32, i32
  }
  func.func @transform_16(%arg0: i32) -> (i32, i32, i32) {
    %c0_i32 = arith.constant 0 : i32
    %c0_i32_0 = arith.constant 0 : i32
    %c0_i32_1 = arith.constant 0 : i32
    return %arg0, %c0_i32, %c0_i32_0 : i32, i32, i32
  }
}

</mosaic_0001>

<llo_original>
// kernel: tpu_custom_call.1
$region0: #{tpu_custom_call.1}
  #allocation0 [shape = 'u32[]', space=smem, size = 0x4, offset = 0x4, fixed_abs, tag = 'smem constant byte address 0x4 - core index']
  #allocation1 [shape = 'u32[144,128]{1,0:T(1,128)}', space=vmem, size = 0x12000, scoped, tag = 'internal scratch']
  #allocation2 [shape = 'f32[8,32]{1,0:T(8,128)}', space=vmem, size = 0x1000, scoped, tag = 'scratch operand']
  %s0 = inlined_call_operand.vmem [shape: f32[2,8,32], index: 0, kind: input, shape index: {}]
  %s1 = inlined_call_operand.vmem [shape: f32[1,32], index: 1, kind: input, shape index: {}]
  %s2 = inlined_call_operand.vmem [shape: f32[1,32], index: 2, kind: input, shape index: {}]
  %s3 = inlined_call_operand.vmem [shape: f32[32,96], index: 3, kind: input, shape index: {}]
  %s4 = inlined_call_operand.vmem [shape: f32[32,32], index: 4, kind: input, shape index: {}]
  %s5 = inlined_call_operand.vmem [shape: f32[1,32], index: 5, kind: input, shape index: {}]
  %s6 = inlined_call_operand.vmem [shape: f32[1,32], index: 6, kind: input, shape index: {}]
  %s7 = inlined_call_operand.vmem [shape: f32[1,32], index: 7, kind: input, shape index: {}]
  %s8 = inlined_call_operand.vmem [shape: f32[1,32], index: 8, kind: input, shape index: {}]
  %s9 = inlined_call_operand.vmem [shape: f32[1,32], index: 9, kind: input, shape index: {}]
  %s10 = inlined_call_operand.vmem [shape: f32[32,128], index: 10, kind: input, shape index: {}]
  %s11 = inlined_call_operand.vmem [shape: f32[1,128], index: 11, kind: input, shape index: {}]
  %s12 = inlined_call_operand.vmem [shape: f32[128,32], index: 12, kind: input, shape index: {}]
  %s13 = inlined_call_operand.vmem [shape: f32[1,32], index: 13, kind: input, shape index: {}]
  %s14 = inlined_call_operand.vmem [shape: f32[1,32], index: 14, kind: input, shape index: {}]
  %s15 = inlined_call_operand.vmem [shape: f32[1,32], index: 15, kind: input, shape index: {}]
  %s16 = inlined_call_operand.hbm [shape: f32[2,8,32], index: 16, kind: output, shape index: {}]
  %s17 = sld [smem:[#allocation0]]
  $region97: #{tpu_custom_call.1} parent=0
    _
  %s19 = ssub.s32 1, %s17
  %s20 = scalar_select 0, %s19, %s17
  $region1: #{tpu_custom_call.1} parent=0
    #allocation3 [shape = 'u8[8192]{0}', space=vmem, size = 0x2000, scoped, tag = 'output window, operand 0']
    #allocation4 [shape = 's32[2]{0}', space=sflag, size = 0x8, scoped, tag = 'scoped memory for tpu_custom_call.1']
    %21 = vsyncpa [#allocation4], 0
    %s22 = scalar_lea.sflag [#allocation4], 1
    %23 = vsyncpa %s22, 0
    loop: start=0, step=1, limit=4
    $region2: #{tpu_custom_call.1} parent=1 // loop_pre_header
      _
    $region3: #{tpu_custom_call.1} parent=1 // loop_header
      %s25 = sphi 0, %s29
      %p26 = scmp.ge.s32.totalorder %s25, 4
      %s35 = sphi 0, %s37
      %s38 = sphi 0, %s35
      %s39 = sphi 0, %s38
      %s55 = sphi 0, %s39
      %s59 = sphi 0, %s59
      %s61 = sphi 0, %s59
      %s62 = sphi 0, %s61
      %s76 = sphi 0, %s62
      %s80 = sphi 0, %s80
      %s82 = sphi 0, %s80
      %s83 = sphi 0, %s82
      %s97 = sphi 0, %s83
      %s101 = sphi 0, %s101
      %s103 = sphi 0, %s101
      %s104 = sphi 0, %s103
      %s118 = sphi 0, %s104
      %s122 = sphi 0, %s122
      %s124 = sphi 0, %s122
      %s125 = sphi 0, %s124
      %s139 = sphi 0, %s125
      %s143 = sphi 0, %s143
      %s145 = sphi 0, %s143
      %s146 = sphi 0, %s145
      %s160 = sphi 0, %s146
      %s164 = sphi 0, %s164
      %s166 = sphi 0, %s164
      %s167 = sphi 0, %s166
      %s181 = sphi 0, %s167
      %s185 = sphi 0, %s185
      %s187 = sphi 0, %s185
      %s188 = sphi 0, %s187
      %s202 = sphi 0, %s188
      %s206 = sphi 0, %s206
      %s208 = sphi 0, %s206
      %s209 = sphi 0, %s208
      %s223 = sphi 0, %s209
      %s227 = sphi 0, %s227
      %s229 = sphi 0, %s227
      %s230 = sphi 0, %s229
      %s244 = sphi 0, %s230
      %s248 = sphi 0, %s248
      %s250 = sphi 0, %s248
      %s251 = sphi 0, %s250
      %s265 = sphi 0, %s251
      %s269 = sphi 0, %s269
      %s271 = sphi 0, %s269
      %s272 = sphi 0, %s271
      %s286 = sphi 0, %s272
      %s290 = sphi 0, %s290
      %s292 = sphi 0, %s290
      %s293 = sphi 0, %s292
      %s307 = sphi 0, %s293
      %s311 = sphi 0, %s311
      %s313 = sphi 0, %s311
      %s314 = sphi 0, %s313
      %s328 = sphi 0, %s314
      %s332 = sphi 0, %s332
      %s334 = sphi 0, %s332
      %s335 = sphi 0, %s334
      %s349 = sphi 0, %s335
      %s353 = sphi 0, %s353
      %s355 = sphi 0, %s353
      %s356 = sphi 0, %s355
      %s370 = sphi 0, %s356
      %s376 = sphi 0, %s378
      %s379 = sphi 0, %s376
      %s380 = sphi 0, %s379
      %s396 = sphi 0, %s380
    $region4: #{tpu_custom_call.1} parent=1 // loop_header_branch
      %28 = sbr.rel (%p26) target = $region8
    $region5: #{tpu_custom_call.1} parent=1 // loop_body
      %s30 = ssub.s32 %s25, 1
      %s31 = ssub.s32 %s25, 2
      %s32 = sadd.s32 %s25, 1
      %s33 = ssub.s32 %s25, %s32
      %p34 = scmp.eq.s32.totalorder %s33, 0
      %s36 = sadd.s32 %s35, 1
      %s37 = scalar_select %p34, %s35, %s36
      %p40 = pneg %p34
      %p41 = scmp.eq.s32.totalorder %s25, 1
      %p42 = por %p40, %p41
      %p43 = scmp.ne.s32.totalorder %s35, %s38
      %p44 = scmp.eq.s32.totalorder %s25, 0
      %p45 = por %p43, %p44
      %p46 = scmp.ne.s32.totalorder %s35, %s38
      %p47 = scmp.eq.s32.totalorder %s30, 1
      %p48 = por %p46, %p47
      %p49 = scmp.ne.s32.totalorder %s38, %s39
      %p50 = scmp.eq.s32.totalorder %s30, 0
      %p51 = por %p49, %p50
      %p52 = scmp.ne.s32.totalorder %s38, %s39
      %p53 = scmp.eq.s32.totalorder %s31, 1
      %p54 = por %p52, %p53
      %p56 = scmp.ne.s32.totalorder %s39, %s55
      %p57 = scmp.eq.s32.totalorder %s31, 0
      %p58 = por %p56, %p57
      %s60 = sadd.s32 %s59, 1
      %p63 = scmp.eq.s32.totalorder %s25, 1
      %p64 = scmp.ne.s32.totalorder %s59, %s61
      %p65 = scmp.eq.s32.totalorder %s25, 0
      %p66 = por %p64, %p65
      %p67 = scmp.ne.s32.totalorder %s59, %s61
      %p68 = scmp.eq.s32.totalorder %s30, 1
      %p69 = por %p67, %p68
      %p70 = scmp.ne.s32.totalorder %s61, %s62
      %p71 = scmp.eq.s32.totalorder %s30, 0
      %p72 = por %p70, %p71
      %p73 = scmp.ne.s32.totalorder %s61, %s62
      %p74 = scmp.eq.s32.totalorder %s31, 1
      %p75 = por %p73, %p74
      %p77 = scmp.ne.s32.totalorder %s62, %s76
      %p78 = scmp.eq.s32.totalorder %s31, 0
      %p79 = por %p77, %p78
      %s81 = sadd.s32 %s80, 1
      %p84 = scmp.eq.s32.totalorder %s25, 1
      %p85 = scmp.ne.s32.totalorder %s80, %s82
      %p86 = scmp.eq.s32.totalorder %s25, 0
      %p87 = por %p85, %p86
      %p88 = scmp.ne.s32.totalorder %s80, %s82
      %p89 = scmp.eq.s32.totalorder %s30, 1
      %p90 = por %p88, %p89
      %p91 = scmp.ne.s32.totalorder %s82, %s83
      %p92 = scmp.eq.s32.totalorder %s30, 0
      %p93 = por %p91, %p92
      %p94 = scmp.ne.s32.totalorder %s82, %s83
      %p95 = scmp.eq.s32.totalorder %s31, 1
      %p96 = por %p94, %p95
      %p98 = scmp.ne.s32.totalorder %s83, %s97
      %p99 = scmp.eq.s32.totalorder %s31, 0
      %p100 = por %p98, %p99
      %s102 = sadd.s32 %s101, 1
      %p105 = scmp.eq.s32.totalorder %s25, 1
      %p106 = scmp.ne.s32.totalorder %s101, %s103
      %p107 = scmp.eq.s32.totalorder %s25, 0
      %p108 = por %p106, %p107
      %p109 = scmp.ne.s32.totalorder %s101, %s103
      %p110 = scmp.eq.s32.totalorder %s30, 1
      %p111 = por %p109, %p110
      %p112 = scmp.ne.s32.totalorder %s103, %s104
      %p113 = scmp.eq.s32.totalorder %s30, 0
      %p114 = por %p112, %p113
      %p115 = scmp.ne.s32.totalorder %s103, %s104
      %p116 = scmp.eq.s32.totalorder %s31, 1
      %p117 = por %p115, %p116
      %p119 = scmp.ne.s32.totalorder %s104, %s118
      %p120 = scmp.eq.s32.totalorder %s31, 0
      %p121 = por %p119, %p120
      %s123 = sadd.s32 %s122, 1
      %p126 = scmp.eq.s32.totalorder %s25, 1
      %p127 = scmp.ne.s32.totalorder %s122, %s124
      %p128 = scmp.eq.s32.totalorder %s25, 0
      %p129 = por %p127, %p128
      %p130 = scmp.ne.s32.totalorder %s122, %s124
      %p131 = scmp.eq.s32.totalorder %s30, 1
      %p132 = por %p130, %p131
      %p133 = scmp.ne.s32.totalorder %s124, %s125
      %p134 = scmp.eq.s32.totalorder %s30, 0
      %p135 = por %p133, %p134
      %p136 = scmp.ne.s32.totalorder %s124, %s125
      %p137 = scmp.eq.s32.totalorder %s31, 1
      %p138 = por %p136, %p137
      %p140 = scmp.ne.s32.totalorder %s125, %s139
      %p141 = scmp.eq.s32.totalorder %s31, 0
      %p142 = por %p140, %p141
      %s144 = sadd.s32 %s143, 1
      %p147 = scmp.eq.s32.totalorder %s25, 1
      %p148 = scmp.ne.s32.totalorder %s143, %s145
      %p149 = scmp.eq.s32.totalorder %s25, 0
      %p150 = por %p148, %p149
      %p151 = scmp.ne.s32.totalorder %s143, %s145
      %p152 = scmp.eq.s32.totalorder %s30, 1
      %p153 = por %p151, %p152
      %p154 = scmp.ne.s32.totalorder %s145, %s146
      %p155 = scmp.eq.s32.totalorder %s30, 0
      %p156 = por %p154, %p155
      %p157 = scmp.ne.s32.totalorder %s145, %s146
      %p158 = scmp.eq.s32.totalorder %s31, 1
      %p159 = por %p157, %p158
      %p161 = scmp.ne.s32.totalorder %s146, %s160
      %p162 = scmp.eq.s32.totalorder %s31, 0
      %p163 = por %p161, %p162
      %s165 = sadd.s32 %s164, 1
      %p168 = scmp.eq.s32.totalorder %s25, 1
      %p169 = scmp.ne.s32.totalorder %s164, %s166
      %p170 = scmp.eq.s32.totalorder %s25, 0
      %p171 = por %p169, %p170
      %p172 = scmp.ne.s32.totalorder %s164, %s166
      %p173 = scmp.eq.s32.totalorder %s30, 1
      %p174 = por %p172, %p173
      %p175 = scmp.ne.s32.totalorder %s166, %s167
      %p176 = scmp.eq.s32.totalorder %s30, 0
      %p177 = por %p175, %p176
      %p178 = scmp.ne.s32.totalorder %s166, %s167
      %p179 = scmp.eq.s32.totalorder %s31, 1
      %p180 = por %p178, %p179
      %p182 = scmp.ne.s32.totalorder %s167, %s181
      %p183 = scmp.eq.s32.totalorder %s31, 0
      %p184 = por %p182, %p183
      %s186 = sadd.s32 %s185, 1
      %p189 = scmp.eq.s32.totalorder %s25, 1
      %p190 = scmp.ne.s32.totalorder %s185, %s187
      %p191 = scmp.eq.s32.totalorder %s25, 0
      %p192 = por %p190, %p191
      %p193 = scmp.ne.s32.totalorder %s185, %s187
      %p194 = scmp.eq.s32.totalorder %s30, 1
      %p195 = por %p193, %p194
      %p196 = scmp.ne.s32.totalorder %s187, %s188
      %p197 = scmp.eq.s32.totalorder %s30, 0
      %p198 = por %p196, %p197
      %p199 = scmp.ne.s32.totalorder %s187, %s188
      %p200 = scmp.eq.s32.totalorder %s31, 1
      %p201 = por %p199, %p200
      %p203 = scmp.ne.s32.totalorder %s188, %s202
      %p204 = scmp.eq.s32.totalorder %s31, 0
      %p205 = por %p203, %p204
      %s207 = sadd.s32 %s206, 1
      %p210 = scmp.eq.s32.totalorder %s25, 1
      %p211 = scmp.ne.s32.totalorder %s206, %s208
      %p212 = scmp.eq.s32.totalorder %s25, 0
      %p213 = por %p211, %p212
      %p214 = scmp.ne.s32.totalorder %s206, %s208
      %p215 = scmp.eq.s32.totalorder %s30, 1
      %p216 = por %p214, %p215
      %p217 = scmp.ne.s32.totalorder %s208, %s209
      %p218 = scmp.eq.s32.totalorder %s30, 0
      %p219 = por %p217, %p218
      %p220 = scmp.ne.s32.totalorder %s208, %s209
      %p221 = scmp.eq.s32.totalorder %s31, 1
      %p222 = por %p220, %p221
      %p224 = scmp.ne.s32.totalorder %s209, %s223
      %p225 = scmp.eq.s32.totalorder %s31, 0
      %p226 = por %p224, %p225
      %s228 = sadd.s32 %s227, 1
      %p231 = scmp.eq.s32.totalorder %s25, 1
      %p232 = scmp.ne.s32.totalorder %s227, %s229
      %p233 = scmp.eq.s32.totalorder %s25, 0
      %p234 = por %p232, %p233
      %p235 = scmp.ne.s32.totalorder %s227, %s229
      %p236 = scmp.eq.s32.totalorder %s30, 1
      %p237 = por %p235, %p236
      %p238 = scmp.ne.s32.totalorder %s229, %s230
      %p239 = scmp.eq.s32.totalorder %s30, 0
      %p240 = por %p238, %p239
      %p241 = scmp.ne.s32.totalorder %s229, %s230
      %p242 = scmp.eq.s32.totalorder %s31, 1
      %p243 = por %p241, %p242
      %p245 = scmp.ne.s32.totalorder %s230, %s244
      %p246 = scmp.eq.s32.totalorder %s31, 0
      %p247 = por %p245, %p246
      %s249 = sadd.s32 %s248, 1
      %p252 = scmp.eq.s32.totalorder %s25, 1
      %p253 = scmp.ne.s32.totalorder %s248, %s250
      %p254 = scmp.eq.s32.totalorder %s25, 0
      %p255 = por %p253, %p254
      %p256 = scmp.ne.s32.totalorder %s248, %s250
      %p257 = scmp.eq.s32.totalorder %s30, 1
      %p258 = por %p256, %p257
      %p259 = scmp.ne.s32.totalorder %s250, %s251
      %p260 = scmp.eq.s32.totalorder %s30, 0
      %p261 = por %p259, %p260
      %p262 = scmp.ne.s32.totalorder %s250, %s251
      %p263 = scmp.eq.s32.totalorder %s31, 1
      %p264 = por %p262, %p263
      %p266 = scmp.ne.s32.totalorder %s251, %s265
      %p267 = scmp.eq.s32.totalorder %s31, 0
      %p268 = por %p266, %p267
      %s270 = sadd.s32 %s269, 1
      %p273 = scmp.eq.s32.totalorder %s25, 1
      %p274 = scmp.ne.s32.totalorder %s269, %s271
      %p275 = scmp.eq.s32.totalorder %s25, 0
      %p276 = por %p274, %p275
      %p277 = scmp.ne.s32.totalorder %s269, %s271
      %p278 = scmp.eq.s32.totalorder %s30, 1
      %p279 = por %p277, %p278
      %p280 = scmp.ne.s32.totalorder %s271, %s272
      %p281 = scmp.eq.s32.totalorder %s30, 0
      %p282 = por %p280, %p281
      %p283 = scmp.ne.s32.totalorder %s271, %s272
      %p284 = scmp.eq.s32.totalorder %s31, 1
      %p285 = por %p283, %p284
      %p287 = scmp.ne.s32.totalorder %s272, %s286
      %p288 = scmp.eq.s32.totalorder %s31, 0
      %p289 = por %p287, %p288
      %s291 = sadd.s32 %s290, 1
      %p294 = scmp.eq.s32.totalorder %s25, 1
      %p295 = scmp.ne.s32.totalorder %s290, %s292
      %p296 = scmp.eq.s32.totalorder %s25, 0
      %p297 = por %p295, %p296
      %p298 = scmp.ne.s32.totalorder %s290, %s292
      %p299 = scmp.eq.s32.totalorder %s30, 1
      %p300 = por %p298, %p299
      %p301 = scmp.ne.s32.totalorder %s292, %s293
      %p302 = scmp.eq.s32.totalorder %s30, 0
      %p303 = por %p301, %p302
      %p304 = scmp.ne.s32.totalorder %s292, %s293
      %p305 = scmp.eq.s32.totalorder %s31, 1
      %p306 = por %p304, %p305
      %p308 = scmp.ne.s32.totalorder %s293, %s307
      %p309 = scmp.eq.s32.totalorder %s31, 0
      %p310 = por %p308, %p309
      %s312 = sadd.s32 %s311, 1
      %p315 = scmp.eq.s32.totalorder %s25, 1
      %p316 = scmp.ne.s32.totalorder %s311, %s313
      %p317 = scmp.eq.s32.totalorder %s25, 0
      %p318 = por %p316, %p317
      %p319 = scmp.ne.s32.totalorder %s311, %s313
      %p320 = scmp.eq.s32.totalorder %s30, 1
      %p321 = por %p319, %p320
      %p322 = scmp.ne.s32.totalorder %s313, %s314
      %p323 = scmp.eq.s32.totalorder %s30, 0
      %p324 = por %p322, %p323
      %p325 = scmp.ne.s32.totalorder %s313, %s314
      %p326 = scmp.eq.s32.totalorder %s31, 1
      %p327 = por %p325, %p326
      %p329 = scmp.ne.s32.totalorder %s314, %s328
      %p330 = scmp.eq.s32.totalorder %s31, 0
      %p331 = por %p329, %p330
      %s333 = sadd.s32 %s332, 1
      %p336 = scmp.eq.s32.totalorder %s25, 1
      %p337 = scmp.ne.s32.totalorder %s332, %s334
      %p338 = scmp.eq.s32.totalorder %s25, 0
      %p339 = por %p337, %p338
      %p340 = scmp.ne.s32.totalorder %s332, %s334
      %p341 = scmp.eq.s32.totalorder %s30, 1
      %p342 = por %p340, %p341
      %p343 = scmp.ne.s32.totalorder %s334, %s335
      %p344 = scmp.eq.s32.totalorder %s30, 0
      %p345 = por %p343, %p344
      %p346 = scmp.ne.s32.totalorder %s334, %s335
      %p347 = scmp.eq.s32.totalorder %s31, 1
      %p348 = por %p346, %p347
      %p350 = scmp.ne.s32.totalorder %s335, %s349
      %p351 = scmp.eq.s32.totalorder %s31, 0
      %p352 = por %p350, %p351
      %s354 = sadd.s32 %s353, 1
      %p357 = scmp.eq.s32.totalorder %s25, 1
      %p358 = scmp.ne.s32.totalorder %s353, %s355
      %p359 = scmp.eq.s32.totalorder %s25, 0
      %p360 = por %p358, %p359
      %p361 = scmp.ne.s32.totalorder %s353, %s355
      %p362 = scmp.eq.s32.totalorder %s30, 1
      %p363 = por %p361, %p362
      %p364 = scmp.ne.s32.totalorder %s355, %s356
      %p365 = scmp.eq.s32.totalorder %s30, 0
      %p366 = por %p364, %p365
      %p367 = scmp.ne.s32.totalorder %s355, %s356
      %p368 = scmp.eq.s32.totalorder %s31, 1
      %p369 = por %p367, %p368
      %p371 = scmp.ne.s32.totalorder %s356, %s370
      %p372 = scmp.eq.s32.totalorder %s31, 0
      %p373 = por %p371, %p372
      %s374 = ssub.s32 %s25, %s32
      %p375 = scmp.eq.s32.totalorder %s374, 0
      %s377 = sadd.s32 %s376, 1
      %s378 = scalar_select %p375, %s376, %s377
      %p381 = pneg %p375
      %p382 = scmp.eq.s32.totalorder %s25, 1
      %p383 = por %p381, %p382
      %p384 = scmp.ne.s32.totalorder %s376, %s379
      %p385 = scmp.eq.s32.totalorder %s25, 0
      %p386 = por %p384, %p385
      %p387 = scmp.ne.s32.totalorder %s376, %s379
      %p388 = scmp.eq.s32.totalorder %s30, 1
      %p389 = por %p387, %p388
      %p390 = scmp.ne.s32.totalorder %s379, %s380
      %p391 = scmp.eq.s32.totalorder %s30, 0
      %p392 = por %p390, %p391
      %p393 = scmp.ne.s32.totalorder %s379, %s380
      %p394 = scmp.eq.s32.totalorder %s31, 1
      %p395 = por %p393, %p394
      %p397 = scmp.ne.s32.totalorder %s380, %s396
      %p398 = scmp.eq.s32.totalorder %s31, 0
      %p399 = por %p397, %p398
      %p400 = scmp.le.s32.totalorder 1, %s25
      %p401 = scmp.lt.s32.totalorder %s25, 3
      %p402 = pnand %p400, %p401
      %p403 = pneg %p402
      // Predicated region
      $region9: #{tpu_custom_call.1} parent=5 // pred_check
        _
      $region10: #{tpu_custom_call.1} parent=5 // pred_check_branch
        %405 = sbr.rel (%p402) target = $region12
      $region11: #{tpu_custom_call.1} parent=5 // pred_region
        %s406 = ssub.s32 %s25, 1
        // Predicated region
        $region13: #{tpu_custom_call.1} parent=11 // pred_check
          %p407 = pneg %p72
        $region14: #{tpu_custom_call.1} parent=11 // pred_check_branch
          %409 = sbr.rel (%p407) target = $region16
        $region15: #{tpu_custom_call.1} parent=11 // pred_region
          _
        $region16: #{tpu_custom_call.1} parent=11 // pred_fallthru
          _
        // Predicated region
        $region17: #{tpu_custom_call.1} parent=11 // pred_check
          %p410 = pneg %p93
        $region18: #{tpu_custom_call.1} parent=11 // pred_check_branch
          %412 = sbr.rel (%p410) target = $region20
        $region19: #{tpu_custom_call.1} parent=11 // pred_region
          _
        $region20: #{tpu_custom_call.1} parent=11 // pred_fallthru
          _
        // Predicated region
        $region21: #{tpu_custom_call.1} parent=11 // pred_check
          %p413 = pneg %p114
        $region22: #{tpu_custom_call.1} parent=11 // pred_check_branch
          %415 = sbr.rel (%p413) target = $region24
        $region23: #{tpu_custom_call.1} parent=11 // pred_region
          _
        $region24: #{tpu_custom_call.1} parent=11 // pred_fallthru
          _
        // Predicated region
        $region25: #{tpu_custom_call.1} parent=11 // pred_check
          %p416 = pneg %p135
        $region26: #{tpu_custom_call.1} parent=11 // pred_check_branch
          %418 = sbr.rel (%p416) target = $region28
        $region27: #{tpu_custom_call.1} parent=11 // pred_region
          _
        $region28: #{tpu_custom_call.1} parent=11 // pred_fallthru
          _
        // Predicated region
        $region29: #{tpu_custom_call.1} parent=11 // pred_check
          %p419 = pneg %p156
        $region30: #{tpu_custom_call.1} parent=11 // pred_check_branch
          %421 = sbr.rel (%p419) target = $region32
        $region31: #{tpu_custom_call.1} parent=11 // pred_region
          _
        $region32: #{tpu_custom_call.1} parent=11 // pred_fallthru
          _
        // Predicated region
        $region33: #{tpu_custom_call.1} parent=11 // pred_check
          %p422 = pneg %p177
        $region34: #{tpu_custom_call.1} parent=11 // pred_check_branch
          %424 = sbr.rel (%p422) target = $region36
        $region35: #{tpu_custom_call.1} parent=11 // pred_region
          _
        $region36: #{tpu_custom_call.1} parent=11 // pred_fallthru
          _
        // Predicated region
        $region37: #{tpu_custom_call.1} parent=11 // pred_check
          %p425 = pneg %p198
        $region38: #{tpu_custom_call.1} parent=11 // pred_check_branch
          %427 = sbr.rel (%p425) target = $region40
        $region39: #{tpu_custom_call.1} parent=11 // pred_region
          _
        $region40: #{tpu_custom_call.1} parent=11 // pred_fallthru
          _
        // Predicated region
        $region41: #{tpu_custom_call.1} parent=11 // pred_check
          %p428 = pneg %p219
        $region42: #{tpu_custom_call.1} parent=11 // pred_check_branch
          %430 = sbr.rel (%p428) target = $region44
        $region43: #{tpu_custom_call.1} parent=11 // pred_region
          _
        $region44: #{tpu_custom_call.1} parent=11 // pred_fallthru
          _
        // Predicated region
        $region45: #{tpu_custom_call.1} parent=11 // pred_check
          %p431 = pneg %p240
        $region46: #{tpu_custom_call.1} parent=11 // pred_check_branch
          %433 = sbr.rel (%p431) target = $region48
        $region47: #{tpu_custom_call.1} parent=11 // pred_region
          _
        $region48: #{tpu_custom_call.1} parent=11 // pred_fallthru
          _
        // Predicated region
        $region49: #{tpu_custom_call.1} parent=11 // pred_check
          %p434 = pneg %p261
        $region50: #{tpu_custom_call.1} parent=11 // pred_check_branch
          %436 = sbr.rel (%p434) target = $region52
        $region51: #{tpu_custom_call.1} parent=11 // pred_region
          _
        $region52: #{tpu_custom_call.1} parent=11 // pred_fallthru
          _
        // Predicated region
        $region53: #{tpu_custom_call.1} parent=11 // pred_check
          %p437 = pneg %p282
        $region54: #{tpu_custom_call.1} parent=11 // pred_check_branch
          %439 = sbr.rel (%p437) target = $region56
        $region55: #{tpu_custom_call.1} parent=11 // pred_region
          _
        $region56: #{tpu_custom_call.1} parent=11 // pred_fallthru
          _
        // Predicated region
        $region57: #{tpu_custom_call.1} parent=11 // pred_check
          %p440 = pneg %p303
        $region58: #{tpu_custom_call.1} parent=11 // pred_check_branch
          %442 = sbr.rel (%p440) target = $region60
        $region59: #{tpu_custom_call.1} parent=11 // pred_region
          _
        $region60: #{tpu_custom_call.1} parent=11 // pred_fallthru
          _
        // Predicated region
        $region61: #{tpu_custom_call.1} parent=11 // pred_check
          %p443 = pneg %p324
        $region62: #{tpu_custom_call.1} parent=11 // pred_check_branch
          %445 = sbr.rel (%p443) target = $region64
        $region63: #{tpu_custom_call.1} parent=11 // pred_region
          _
        $region64: #{tpu_custom_call.1} parent=11 // pred_fallthru
          _
        // Predicated region
        $region65: #{tpu_custom_call.1} parent=11 // pred_check
          %p446 = pneg %p345
        $region66: #{tpu_custom_call.1} parent=11 // pred_check_branch
          %448 = sbr.rel (%p446) target = $region68
        $region67: #{tpu_custom_call.1} parent=11 // pred_region
          _
        $region68: #{tpu_custom_call.1} parent=11 // pred_fallthru
          _
        // Predicated region
        $region69: #{tpu_custom_call.1} parent=11 // pred_check
          %p449 = pneg %p366
        $region70: #{tpu_custom_call.1} parent=11 // pred_check_branch
          %451 = sbr.rel (%p449) target = $region72
        $region71: #{tpu_custom_call.1} parent=11 // pred_region
          _
        $region72: #{tpu_custom_call.1} parent=11 // pred_fallthru
          _
      $region12: #{tpu_custom_call.1} parent=5 // pred_fallthru
        _
      %p452 = scmp.lt.s32.totalorder %s25, 2
      // Predicated region
      $region73: #{tpu_custom_call.1} parent=5 // pred_check
        %p453 = pneg %p452
      $region74: #{tpu_custom_call.1} parent=5 // pred_check_branch
        %455 = sbr.rel (%p453) target = $region76
      $region75: #{tpu_custom_call.1} parent=5 // pred_region
        // Predicated region
        $region77: #{tpu_custom_call.1} parent=75 // pred_check
          %p456 = pneg %p45
        $region78: #{tpu_custom_call.1} parent=75 // pred_check_branch
          %458 = sbr.rel (%p456) target = $region80
        $region79: #{tpu_custom_call.1} parent=75 // pred_region
          %p459 = scmp.lt.s32.totalorder %s25, 1
          %s460 = scalar_select %p459, %s25, 1
          %s461 = smul.addr %s460, 8
          %s462 = scalar_lea.vmem %s0, %s461
        $region80: #{tpu_custom_call.1} parent=75 // pred_fallthru
          _
      $region76: #{tpu_custom_call.1} parent=5 // pred_fallthru
        _
      %p463 = scmp.le.s32.totalorder 1, %s25
      %p464 = scmp.lt.s32.totalorder %s25, 3
      %p465 = pnand %p463, %p464
      %p466 = pneg %p465
      // Predicated region
      $region81: #{tpu_custom_call.1} parent=5 // pred_check
        _
      $region82: #{tpu_custom_call.1} parent=5 // pred_check_branch
        %468 = sbr.rel (%p465) target = $region84
      $region83: #{tpu_custom_call.1} parent=5 // pred_region
        %s469 = ssub.s32 %s25, 1
        %p470 = scmp.lt.s32.totalorder %s30, 1
        %s471 = scalar_select %p470, %s30, 1
        %s472 = smul.addr %s471, 8
        %s473 = scalar_lea.vmem %s0, %s472
        %p474 = pneg %p51
        %p475 = pneg %p48
        %p476 = pneg %p72
        %p477 = pneg %p69
        %p478 = pneg %p93
        %p479 = pneg %p90
        %p480 = pneg %p114
        %p481 = pneg %p111
        %p482 = pneg %p135
        %p483 = pneg %p132
        %p484 = pneg %p156
        %p485 = pneg %p153
        %p486 = pneg %p177
        %p487 = pneg %p174
        %p488 = pneg %p198
        %p489 = pneg %p195
        %p490 = pneg %p219
        %p491 = pneg %p216
        %p492 = pneg %p240
        %p493 = pneg %p237
        %p494 = pneg %p261
        %p495 = pneg %p258
        %p496 = pneg %p282
        %p497 = pneg %p279
        %p498 = pneg %p303
        %p499 = pneg %p300
        %p500 = pneg %p324
        %p501 = pneg %p321
        %p502 = pneg %p345
        %p503 = pneg %p342
        %p504 = pneg %p366
        %p505 = pneg %p363
        %p506 = pneg %p392
        %p507 = pneg %p389
        %s508 = sand.u32 %s379, 1
        %s509 = scalar_lea.sflag [#allocation4], %s508
        %s510 = sand.u32 %s379, 1
        %s511 = smul.addr %s510, 8
        %s512 = scalar_lea.vmem [#allocation3], %s511
        %p513 = scmp.lt.s32.totalorder %s30, 1
        %s514 = scalar_select %p513, %s30, 1
        %s515 = smul.addr %s514, 8
        %s516 = scalar_lea.vmem %s0, %s515
        %v517 = vld [vmem:[%s516] sm:$0xff]
        %v518 = vld [vmem:[%s1] sm:$0x1]
        %v519 = vld [vmem:[%s2] sm:$0x1]
        %vm520 = vcmask 261120
        %v521 = vsel %vm520, %v517, 0.0
        %522 = vadd.xlane.f32.xlu0 %v521
        %v523 = vpop.xlane.xlu0 %522
        %v524 = vrcp.pop 32.0
        %v525 = vmul.f32 %v523, %v524
        %v526 = vmul.f32 %v517, %v517
        %v527 = vsel %vm520, %v526, 0.0
        %528 = vadd.xlane.f32.xlu0 %v527
        %v529 = vpop.xlane.xlu0 %528
        %v530 = vmul.f32 %v529, %v524
        %v531 = vmul.f32 %v525, %v525
        %v532 = vsub.f32 %v530, %v531
        %v533 = vadd.f32 %v532, 1e-05
        %v534 = vrsqrt.pop %v533
        %v535 = vsub.f32 %v517, %v525
        %v536 = vmul.f32 %v535, %v534
        %v538 = vlaneseq
        %v539 = vshrl.u32 %v538, 7
        %v540 = vsub.s32 0, %v539
        %v541 = vrot.slane %v518, %v540
        %v543 = vmul.f32 %v541, %v536
        %v545 = vlaneseq
        %v546 = vshrl.u32 %v545, 7
        %v547 = vsub.s32 0, %v546
        %v548 = vrot.slane %v519, %v547
        %v550 = vadd.f32 %v543, %v548
        %v551 = vld [vmem:[%s3] sm:$0xff]
        %v552 = vld [vmem:[%s3 + $0x8] sm:$0xff]
        %v553 = vld [vmem:[%s3 + $0x10] sm:$0xff]
        %v554 = vld [vmem:[%s3 + $0x18] sm:$0xff]
        %v556 = vsel %vm520, %v550, 0
        %558 = vmatprep.subr.mxu0 0.0
        %559 = vmatpush1.msra.mxu0 %v551
        %560 = vmatprep.subr.mxu0 0.0
        %561 = vmatpush1.msra.mxu0 %v552
        %562 = vmatprep.subr.mxu0 0.0
        %563 = vmatpush1.msra.mxu0 %v553
        %564 = vmatprep.subr.mxu0 0.0
        %565 = vmatpush1.msra.mxu0 %v554
        %566 = vmatprep.subr.mxu0 0.0
        %567 = vmatpush1.msra.mxu0 0.0
        %568 = vmatprep.subr.mxu0 0.0
        %569 = vmatpush1.msra.mxu0 0.0
        %570 = vmatprep.subr.mxu0 0.0
        %571 = vmatpush1.msra.mxu0 0.0
        %572 = vmatprep.subr.mxu0 0.0
        %573 = vmatpush1.msra.mxu0 0.0
        %574 = vmatprep.subr.mxu0 0.0
        %575 = vmatpush1.msra.mxu0 0.0
        %576 = vmatprep.subr.mxu0 0.0
        %577 = vmatpush1.msra.mxu0 0.0
        %578 = vmatprep.subr.mxu0 0.0
        %579 = vmatpush1.msra.mxu0 0.0
        %580 = vmatprep.subr.mxu0 0.0
        %581 = vmatpush1.msra.mxu0 0.0
        %582 = vmatprep.subr.mxu0 0.0
        %583 = vmatpush1.msra.mxu0 0.0
        %584 = vmatprep.subr.mxu0 0.0
        %585 = vmatpush1.msra.mxu0 0.0
        %586 = vmatprep.subr.mxu0 0.0
        %587 = vmatpush1.msra.mxu0 0.0
        %588 = vmatprep.subr.mxu0 0.0
        %589 = vmatpush1.msra.mxu0 0.0
        %590 = vmatprep.subr.mxu0 0.0
        %591 = vmatpush1.msra.mxu0 0.0
        %592 = vmatprep.subr.mxu0 0.0
        %593 = vmatpush1.msra.mxu0 0.0
        %594 = vmatprep.subr.mxu0 0.0
        %595 = vmatpush1.msra.mxu0 0.0
        %596 = vmatprep.subr.mxu0 0.0
        %597 = vmatpush1.msra.mxu0 0.0
        %598 = vmatprep.subr.mxu0 0.0
        %599 = vmatpush1.msra.mxu0 0.0
        %600 = vmatprep.subr.mxu0 0.0
        %601 = vmatpush1.msra.mxu0 0.0
        %602 = vmatprep.subr.mxu0 0.0
        %603 = vmatpush1.msra.mxu0 0.0
        %604 = vmatprep.subr.mxu0 0.0
        %605 = vmatpush1.msra.mxu0 0.0
        %606 = vmatprep.subr.mxu0 0.0
        %607 = vmatpush1.msra.mxu0 0.0
        %608 = vmatprep.subr.mxu0 0.0
        %609 = vmatpush1.msra.mxu0 0.0
        %610 = vmatprep.subr.mxu0 0.0
        %611 = vmatpush1.msra.mxu0 0.0
        %612 = vmatprep.subr.mxu0 0.0
        %613 = vmatpush1.msra.mxu0 0.0
        %614 = vmatprep.subr.mxu0 0.0
        %615 = vmatpush1.msra.mxu0 0.0
        %616 = vmatprep.subr.mxu0 0.0
        %617 = vmatpush1.msra.mxu0 0.0
        %618 = vmatprep.subr.mxu0 0.0
        %619 = vmatpush1.msra.mxu0 0.0
        %620 = vmatprep.subr.mxu0 0.0
        %621 = vmatpush1.msra.mxu0 0.0
        %622 = vmatprep.mubr.f32.mxu0 0.0
        %623 = vmatmul.mubr.f32.gmra.mrb[0].mxu0 %v556
        %v624 = vpop.f32.mrb[0].mxu0
        %v625 = vadd.f32 0.0, %v624
        %v626 = vpop.f32.mrb[0].mxu0
        %627 = vdwg.mxu0
        %v628 = vmul.f32 %v625, 0.35355338
        %v629 = vlaneseq
        %v630 = vshrl.u32 %v629, 7
        %v631 = vlaneseq
        %v632 = vand.u32 %v631, 127
        %vm633 = vcmp.gt.s32.totalorder %v632, %v630
        %635 = vrot.lane.b32.xlu0 %v625, 96
        %v636 = vpop.permute.xlu0 %635
        %vm637 = vcmask 64512
        %v639 = vsel %vm637, %v628, 0
        %v641 = vsel %vm637, %v636, 0
        %643 = vmatprep.subr.mxu0 0.0
        %644 = vmatpush1.xpose.msra.mxu0 %v641
        %645 = vmatprep.subr.mxu0 0.0
        %646 = vmatpush1.xpose.msra.mxu0 0.0
        %647 = vmatprep.subr.mxu0 0.0
        %648 = vmatpush1.xpose.msra.mxu0 0.0
        %649 = vmatprep.subr.mxu0 0.0
        %650 = vmatpush1.xpose.msra.mxu0 0.0
        %651 = vmatprep.subr.mxu0 0.0
        %652 = vmatpush1.xpose.msra.mxu0 0.0
        %653 = vmatprep.subr.mxu0 0.0
        %654 = vmatpush1.xpose.msra.mxu0 0.0
        %655 = vmatprep.subr.mxu0 0.0
        %656 = vmatpush1.xpose.msra.mxu0 0.0
        %657 = vmatprep.subr.mxu0 0.0
        %658 = vmatpush1.xpose.msra.mxu0 0.0
        %659 = vmatprep.subr.mxu0 0.0
        %660 = vmatpush1.xpose.msra.mxu0 0.0
        %661 = vmatprep.subr.mxu0 0.0
        %662 = vmatpush1.xpose.msra.mxu0 0.0
        %663 = vmatprep.subr.mxu0 0.0
        %664 = vmatpush1.xpose.msra.mxu0 0.0
        %665 = vmatprep.subr.mxu0 0.0
        %666 = vmatpush1.xpose.msra.mxu0 0.0
        %667 = vmatprep.subr.mxu0 0.0
        %668 = vmatpush1.xpose.msra.mxu0 0.0
        %669 = vmatprep.subr.mxu0 0.0
        %670 = vmatpush1.xpose.msra.mxu0 0.0
        %671 = vmatprep.subr.mxu0 0.0
        %672 = vmatpush1.xpose.msra.mxu0 0.0
        %673 = vmatprep.subr.mxu0 0.0
        %674 = vmatpush1.xpose.msra.mxu0 0.0
        %675 = vmatprep.subr.mxu0 0.0
        %676 = vmatpush1.xpose.msra.mxu0 0.0
        %677 = vmatprep.subr.mxu0 0.0
        %678 = vmatpush1.xpose.msra.mxu0 0.0
        %679 = vmatprep.subr.mxu0 0.0
        %680 = vmatpush1.xpose.msra.mxu0 0.0
        %681 = vmatprep.subr.mxu0 0.0
        %682 = vmatpush1.xpose.msra.mxu0 0.0
        %683 = vmatprep.subr.mxu0 0.0
        %684 = vmatpush1.xpose.msra.mxu0 0.0
        %685 = vmatprep.subr.mxu0 0.0
        %686 = vmatpush1.xpose.msra.mxu0 0.0
        %687 = vmatprep.subr.mxu0 0.0
        %688 = vmatpush1.xpose.msra.mxu0 0.0
        %689 = vmatprep.subr.mxu0 0.0
        %690 = vmatpush1.xpose.msra.mxu0 0.0
        %691 = vmatprep.subr.mxu0 0.0
        %692 = vmatpush1.xpose.msra.mxu0 0.0
        %693 = vmatprep.subr.mxu0 0.0
        %694 = vmatpush1.xpose.msra.mxu0 0.0
        %695 = vmatprep.subr.mxu0 0.0
        %696 = vmatpush1.xpose.msra.mxu0 0.0
        %697 = vmatprep.subr.mxu0 0.0
        %698 = vmatpush1.xpose.msra.mxu0 0.0
        %699 = vmatprep.subr.mxu0 0.0
        %700 = vmatpush1.xpose.msra.mxu0 0.0
        %701 = vmatprep.subr.mxu0 0.0
        %702 = vmatpush1.xpose.msra.mxu0 0.0
        %703 = vmatprep.subr.mxu0 0.0
        %704 = vmatpush1.xpose.msra.mxu0 0.0
        %705 = vmatprep.subr.mxu0 0.0
        %706 = vmatpush1.xpose.msra.mxu0 0.0
        %707 = vmatprep.mubr.f32.mxu0 0.0
        %708 = vmatmul.mubr.f32.gmra.mrb[0].mxu0 %v639
        %v709 = vpop.f32.mrb[0].mxu0
        %v710 = vadd.f32 0.0, %v709
        %v711 = vpop.f32.mrb[0].mxu0
        %712 = vdwg.mxu0
        %v713 = vsel %vm633, -1e+30, %v710
        %v714 = vsel %vm637, %v713, -inf
        %715 = vmax.xlane.f32.xlu0 %v714
        %v716 = vpop.xlane.xlu0 %715
        %v717 = vsub.f32 %v713, %v716
        %v718 = vmul.f32 %v717, 1.442695
        %v719 = vpow.pop %v718
        %v720 = vsel %vm637, %v719, 0.0
        %721 = vadd.xlane.f32.xlu0 %v720
        %v722 = vpop.xlane.xlu0 %721
        %v723 = vrcp.pop %v722
        %v724 = vmul.f32 %v719, %v723
        %725 = vrot.lane.b32.xlu0 %v625, 64
        %v726 = vpop.permute.xlu0 %725
        %v729 = vsel %vm637, %v724, 0
        %731 = vmatprep.subr.mxu0 0.0
        %732 = vmatpush1.msra.mxu0 %v726
        %733 = vmatprep.subr.mxu0 0.0
        %734 = vmatpush1.msra.mxu0 0.0
        %735 = vmatprep.subr.mxu0 0.0
        %736 = vmatpush1.msra.mxu0 0.0
        %737 = vmatprep.subr.mxu0 0.0
        %738 = vmatpush1.msra.mxu0 0.0
        %739 = vmatprep.subr.mxu0 0.0
        %740 = vmatpush1.msra.mxu0 0.0
        %741 = vmatprep.subr.mxu0 0.0
        %742 = vmatpush1.msra.mxu0 0.0
        %743 = vmatprep.subr.mxu0 0.0
        %744 = vmatpush1.msra.mxu0 0.0
        %745 = vmatprep.subr.mxu0 0.0
        %746 = vmatpush1.msra.mxu0 0.0
        %747 = vmatprep.subr.mxu0 0.0
        %748 = vmatpush1.msra.mxu0 0.0
        %749 = vmatprep.subr.mxu0 0.0
        %750 = vmatpush1.msra.mxu0 0.0
        %751 = vmatprep.subr.mxu0 0.0
        %752 = vmatpush1.msra.mxu0 0.0
        %753 = vmatprep.subr.mxu0 0.0
        %754 = vmatpush1.msra.mxu0 0.0
        %755 = vmatprep.subr.mxu0 0.0
        %756 = vmatpush1.msra.mxu0 0.0
        %757 = vmatprep.subr.mxu0 0.0
        %758 = vmatpush1.msra.mxu0 0.0
        %759 = vmatprep.subr.mxu0 0.0
        %760 = vmatpush1.msra.mxu0 0.0
        %761 = vmatprep.subr.mxu0 0.0
        %762 = vmatpush1.msra.mxu0 0.0
        %763 = vmatprep.subr.mxu0 0.0
        %764 = vmatpush1.msra.mxu0 0.0
        %765 = vmatprep.subr.mxu0 0.0
        %766 = vmatpush1.msra.mxu0 0.0
        %767 = vmatprep.subr.mxu0 0.0
        %768 = vmatpush1.msra.mxu0 0.0
        %769 = vmatprep.subr.mxu0 0.0
        %770 = vmatpush1.msra.mxu0 0.0
        %771 = vmatprep.subr.mxu0 0.0
        %772 = vmatpush1.msra.mxu0 0.0
        %773 = vmatprep.subr.mxu0 0.0
        %774 = vmatpush1.msra.mxu0 0.0
        %775 = vmatprep.subr.mxu0 0.0
        %776 = vmatpush1.msra.mxu0 0.0
        %777 = vmatprep.subr.mxu0 0.0
        %778 = vmatpush1.msra.mxu0 0.0
        %779 = vmatprep.subr.mxu0 0.0
        %780 = vmatpush1.msra.mxu0 0.0
        %781 = vmatprep.subr.mxu0 0.0
        %782 = vmatpush1.msra.mxu0 0.0
        %783 = vmatprep.subr.mxu0 0.0
        %784 = vmatpush1.msra.mxu0 0.0
        %785 = vmatprep.subr.mxu0 0.0
        %786 = vmatpush1.msra.mxu0 0.0
        %787 = vmatprep.subr.mxu0 0.0
        %788 = vmatpush1.msra.mxu0 0.0
        %789 = vmatprep.subr.mxu0 0.0
        %790 = vmatpush1.msra.mxu0 0.0
        %791 = vmatprep.subr.mxu0 0.0
        %792 = vmatpush1.msra.mxu0 0.0
        %793 = vmatprep.subr.mxu0 0.0
        %794 = vmatpush1.msra.mxu0 0.0
        %795 = vmatprep.mubr.f32.mxu0 0.0
        %796 = vmatmul.mubr.f32.gmra.mrb[0].mxu0 %v729
        %v797 = vpop.f32.mrb[0].mxu0
        %v798 = vadd.f32 0.0, %v797
        %v799 = vpop.f32.mrb[0].mxu0
        %800 = vdwg.mxu0
        %801 = vst.msk [vmem:[#allocation2] sm:$0xff] %vm637, %v798
        %802 = vrot.lane.b32.xlu0 %v628, 120
        %v803 = vpop.permute.xlu0 %802
        %804 = vrot.lane.b32.xlu0 %v625, 88
        %v805 = vpop.permute.xlu0 %804
        %v806 = vsel %vm637, %v803, 0
        %v808 = vsel %vm637, %v805, 0
        %810 = vmatprep.subr.mxu0 0.0
        %811 = vmatpush1.xpose.msra.mxu0 %v808
        %812 = vmatprep.subr.mxu0 0.0
        %813 = vmatpush1.xpose.msra.mxu0 0.0
        %814 = vmatprep.subr.mxu0 0.0
        %815 = vmatpush1.xpose.msra.mxu0 0.0
        %816 = vmatprep.subr.mxu0 0.0
        %817 = vmatpush1.xpose.msra.mxu0 0.0
        %818 = vmatprep.subr.mxu0 0.0
        %819 = vmatpush1.xpose.msra.mxu0 0.0
        %820 = vmatprep.subr.mxu0 0.0
        %821 = vmatpush1.xpose.msra.mxu0 0.0
        %822 = vmatprep.subr.mxu0 0.0
        %823 = vmatpush1.xpose.msra.mxu0 0.0
        %824 = vmatprep.subr.mxu0 0.0
        %825 = vmatpush1.xpose.msra.mxu0 0.0
        %826 = vmatprep.subr.mxu0 0.0
        %827 = vmatpush1.xpose.msra.mxu0 0.0
        %828 = vmatprep.subr.mxu0 0.0
        %829 = vmatpush1.xpose.msra.mxu0 0.0
        %830 = vmatprep.subr.mxu0 0.0
        %831 = vmatpush1.xpose.msra.mxu0 0.0
        %832 = vmatprep.subr.mxu0 0.0
        %833 = vmatpush1.xpose.msra.mxu0 0.0
        %834 = vmatprep.subr.mxu0 0.0
        %835 = vmatpush1.xpose.msra.mxu0 0.0
        %836 = vmatprep.subr.mxu0 0.0
        %837 = vmatpush1.xpose.msra.mxu0 0.0
        %838 = vmatprep.subr.mxu0 0.0
        %839 = vmatpush1.xpose.msra.mxu0 0.0
        %840 = vmatprep.subr.mxu0 0.0
        %841 = vmatpush1.xpose.msra.mxu0 0.0
        %842 = vmatprep.subr.mxu0 0.0
        %843 = vmatpush1.xpose.msra.mxu0 0.0
        %844 = vmatprep.subr.mxu0 0.0
        %845 = vmatpush1.xpose.msra.mxu0 0.0
        %846 = vmatprep.subr.mxu0 0.0
        %847 = vmatpush1.xpose.msra.mxu0 0.0
        %848 = vmatprep.subr.mxu0 0.0
        %849 = vmatpush1.xpose.msra.mxu0 0.0
        %850 = vmatprep.subr.mxu0 0.0
        %851 = vmatpush1.xpose.msra.mxu0 0.0
        %852 = vmatprep.subr.mxu0 0.0
        %853 = vmatpush1.xpose.msra.mxu0 0.0
        %854 = vmatprep.subr.mxu0 0.0
        %855 = vmatpush1.xpose.msra.mxu0 0.0
        %856 = vmatprep.subr.mxu0 0.0
        %857 = vmatpush1.xpose.msra.mxu0 0.0
        %858 = vmatprep.subr.mxu0 0.0
        %859 = vmatpush1.xpose.msra.mxu0 0.0
        %860 = vmatprep.subr.mxu0 0.0
        %861 = vmatpush1.xpose.msra.mxu0 0.0
        %862 = vmatprep.subr.mxu0 0.0
        %863 = vmatpush1.xpose.msra.mxu0 0.0
        %864 = vmatprep.subr.mxu0 0.0
        %865 = vmatpush1.xpose.msra.mxu0 0.0
        %866 = vmatprep.subr.mxu0 0.0
        %867 = vmatpush1.xpose.msra.mxu0 0.0
        %868 = vmatprep.subr.mxu0 0.0
        %869 = vmatpush1.xpose.msra.mxu0 0.0
        %870 = vmatprep.subr.mxu0 0.0
        %871 = vmatpush1.xpose.msra.mxu0 0.0
        %872 = vmatprep.subr.mxu0 0.0
        %873 = vmatpush1.xpose.msra.mxu0 0.0
        %874 = vmatprep.mubr.f32.mxu0 0.0
        %875 = vmatmul.mubr.f32.gmra.mrb[0].mxu0 %v806
        %v876 = vpop.f32.mrb[0].mxu0
        %v877 = vadd.f32 0.0, %v876
        %v878 = vpop.f32.mrb[0].mxu0
        %879 = vdwg.mxu0
        %v880 = vsel %vm633, -1e+30, %v877
        %v881 = vsel %vm637, %v880, -inf
        %882 = vmax.xlane.f32.xlu0 %v881
        %v883 = vpop.xlane.xlu0 %882
        %v884 = vsub.f32 %v880, %v883
        %v885 = vmul.f32 %v884, 1.442695
        %v886 = vpow.pop %v885
        %v887 = vsel %vm637, %v886, 0.0
        %888 = vadd.xlane.f32.xlu0 %v887
        %v889 = vpop.xlane.xlu0 %888
        %v890 = vrcp.pop %v889
        %v891 = vmul.f32 %v886, %v890
        %892 = vrot.lane.b32.xlu0 %v625, 56
        %v893 = vpop.permute.xlu0 %892
        %v896 = vsel %vm637, %v891, 0
        %898 = vmatprep.subr.mxu0 0.0
        %899 = vmatpush1.msra.mxu0 %v893
        %900 = vmatprep.subr.mxu0 0.0
        %901 = vmatpush1.msra.mxu0 0.0
        %902 = vmatprep.subr.mxu0 0.0
        %903 = vmatpush1.msra.mxu0 0.0
        %904 = vmatprep.subr.mxu0 0.0
        %905 = vmatpush1.msra.mxu0 0.0
        %906 = vmatprep.subr.mxu0 0.0
        %907 = vmatpush1.msra.mxu0 0.0
        %908 = vmatprep.subr.mxu0 0.0
        %909 = vmatpush1.msra.mxu0 0.0
        %910 = vmatprep.subr.mxu0 0.0
        %911 = vmatpush1.msra.mxu0 0.0
        %912 = vmatprep.subr.mxu0 0.0
        %913 = vmatpush1.msra.mxu0 0.0
        %914 = vmatprep.subr.mxu0 0.0
        %915 = vmatpush1.msra.mxu0 0.0
        %916 = vmatprep.subr.mxu0 0.0
        %917 = vmatpush1.msra.mxu0 0.0
        %918 = vmatprep.subr.mxu0 0.0
        %919 = vmatpush1.msra.mxu0 0.0
        %920 = vmatprep.subr.mxu0 0.0
        %921 = vmatpush1.msra.mxu0 0.0
        %922 = vmatprep.subr.mxu0 0.0
        %923 = vmatpush1.msra.mxu0 0.0
        %924 = vmatprep.subr.mxu0 0.0
        %925 = vmatpush1.msra.mxu0 0.0
        %926 = vmatprep.subr.mxu0 0.0
        %927 = vmatpush1.msra.mxu0 0.0
        %928 = vmatprep.subr.mxu0 0.0
        %929 = vmatpush1.msra.mxu0 0.0
        %930 = vmatprep.subr.mxu0 0.0
        %931 = vmatpush1.msra.mxu0 0.0
        %932 = vmatprep.subr.mxu0 0.0
        %933 = vmatpush1.msra.mxu0 0.0
        %934 = vmatprep.subr.mxu0 0.0
        %935 = vmatpush1.msra.mxu0 0.0
        %936 = vmatprep.subr.mxu0 0.0
        %937 = vmatpush1.msra.mxu0 0.0
        %938 = vmatprep.subr.mxu0 0.0
        %939 = vmatpush1.msra.mxu0 0.0
        %940 = vmatprep.subr.mxu0 0.0
        %941 = vmatpush1.msra.mxu0 0.0
        %942 = vmatprep.subr.mxu0 0.0
        %943 = vmatpush1.msra.mxu0 0.0
        %944 = vmatprep.subr.mxu0 0.0
        %945 = vmatpush1.msra.mxu0 0.0
        %946 = vmatprep.subr.mxu0 0.0
        %947 = vmatpush1.msra.mxu0 0.0
        %948 = vmatprep.subr.mxu0 0.0
        %949 = vmatpush1.msra.mxu0 0.0
        %950 = vmatprep.subr.mxu0 0.0
        %951 = vmatpush1.msra.mxu0 0.0
        %952 = vmatprep.subr.mxu0 0.0
        %953 = vmatpush1.msra.mxu0 0.0
        %954 = vmatprep.subr.mxu0 0.0
        %955 = vmatpush1.msra.mxu0 0.0
        %956 = vmatprep.subr.mxu0 0.0
        %957 = vmatpush1.msra.mxu0 0.0
        %958 = vmatprep.subr.mxu0 0.0
        %959 = vmatpush1.msra.mxu0 0.0
        %960 = vmatprep.subr.mxu0 0.0
        %961 = vmatpush1.msra.mxu0 0.0
        %962 = vmatprep.mubr.f32.mxu0 0.0
        %963 = vmatmul.mubr.f32.gmra.mrb[0].mxu0 %v896
        %v964 = vpop.f32.mrb[0].mxu0
        %v965 = vadd.f32 0.0, %v964
        %v966 = vpop.f32.mrb[0].mxu0
        %967 = vdwg.mxu0
        %969 = vrot.lane.b32.xlu0 %v965, 8
        %v970 = vpop.permute.xlu0 %969
        %vm972 = vcmask 130112
        %973 = vst.msk [vmem:[#allocation2] sm:$0xff] %vm972, %v970
        %974 = vrot.lane.b32.xlu0 %v628, 112
        %v975 = vpop.permute.xlu0 %974
        %976 = vrot.lane.b32.xlu0 %v625, 80
        %v977 = vpop.permute.xlu0 %976
        %v978 = vsel %vm637, %v975, 0
        %v980 = vsel %vm637, %v977, 0
        %982 = vmatprep.subr.mxu0 0.0
        %983 = vmatpush1.xpose.msra.mxu0 %v980
        %984 = vmatprep.subr.mxu0 0.0
        %985 = vmatpush1.xpose.msra.mxu0 0.0
        %986 = vmatprep.subr.mxu0 0.0
        %987 = vmatpush1.xpose.msra.mxu0 0.0
        %988 = vmatprep.subr.mxu0 0.0
        %989 = vmatpush1.xpose.msra.mxu0 0.0
        %990 = vmatprep.subr.mxu0 0.0
        %991 = vmatpush1.xpose.msra.mxu0 0.0
        %992 = vmatprep.subr.mxu0 0.0
        %993 = vmatpush1.xpose.msra.mxu0 0.0
        %994 = vmatprep.subr.mxu0 0.0
        %995 = vmatpush1.xpose.msra.mxu0 0.0
        %996 = vmatprep.subr.mxu0 0.0
        %997 = vmatpush1.xpose.msra.mxu0 0.0
        %998 = vmatprep.subr.mxu0 0.0
        %999 = vmatpush1.xpose.msra.mxu0 0.0
        %1000 = vmatprep.subr.mxu0 0.0
        %1001 = vmatpush1.xpose.msra.mxu0 0.0
        %1002 = vmatprep.subr.mxu0 0.0
        %1003 = vmatpush1.xpose.msra.mxu0 0.0
        %1004 = vmatprep.subr.mxu0 0.0
        %1005 = vmatpush1.xpose.msra.mxu0 0.0
        %1006 = vmatprep.subr.mxu0 0.0
        %1007 = vmatpush1.xpose.msra.mxu0 0.0
        %1008 = vmatprep.subr.mxu0 0.0
        %1009 = vmatpush1.xpose.msra.mxu0 0.0
        %1010 = vmatprep.subr.mxu0 0.0
        %1011 = vmatpush1.xpose.msra.mxu0 0.0
        %1012 = vmatprep.subr.mxu0 0.0
        %1013 = vmatpush1.xpose.msra.mxu0 0.0
        %1014 = vmatprep.subr.mxu0 0.0
        %1015 = vmatpush1.xpose.msra.mxu0 0.0
        %1016 = vmatprep.subr.mxu0 0.0
        %1017 = vmatpush1.xpose.msra.mxu0 0.0
        %1018 = vmatprep.subr.mxu0 0.0
        %1019 = vmatpush1.xpose.msra.mxu0 0.0
        %1020 = vmatprep.subr.mxu0 0.0
        %1021 = vmatpush1.xpose.msra.mxu0 0.0
        %1022 = vmatprep.subr.mxu0 0.0
        %1023 = vmatpush1.xpose.msra.mxu0 0.0
        %1024 = vmatprep.subr.mxu0 0.0
        %1025 = vmatpush1.xpose.msra.mxu0 0.0
        %1026 = vmatprep.subr.mxu0 0.0
        %1027 = vmatpush1.xpose.msra.mxu0 0.0
        %1028 = vmatprep.subr.mxu0 0.0
        %1029 = vmatpush1.xpose.msra.mxu0 0.0
        %1030 = vmatprep.subr.mxu0 0.0
        %1031 = vmatpush1.xpose.msra.mxu0 0.0
        %1032 = vmatprep.subr.mxu0 0.0
        %1033 = vmatpush1.xpose.msra.mxu0 0.0
        %1034 = vmatprep.subr.mxu0 0.0
        %1035 = vmatpush1.xpose.msra.mxu0 0.0
        %1036 = vmatprep.subr.mxu0 0.0
        %1037 = vmatpush1.xpose.msra.mxu0 0.0
        %1038 = vmatprep.subr.mxu0 0.0
        %1039 = vmatpush1.xpose.msra.mxu0 0.0
        %1040 = vmatprep.subr.mxu0 0.0
        %1041 = vmatpush1.xpose.msra.mxu0 0.0
        %1042 = vmatprep.subr.mxu0 0.0
        %1043 = vmatpush1.xpose.msra.mxu0 0.0
        %1044 = vmatprep.subr.mxu0 0.0
        %1045 = vmatpush1.xpose.msra.mxu0 0.0
        %1046 = vmatprep.mubr.f32.mxu0 0.0
        %1047 = vmatmul.mubr.f32.gmra.mrb[0].mxu0 %v978
        %v1048 = vpop.f32.mrb[0].mxu0
        %v1049 = vadd.f32 0.0, %v1048
        %v1050 = vpop.f32.mrb[0].mxu0
        %1051 = vdwg.mxu0
        %v1052 = vsel %vm633, -1e+30, %v1049
        %v1053 = vsel %vm637, %v1052, -inf
        %1054 = vmax.xlane.f32.xlu0 %v1053
        %v1055 = vpop.xlane.xlu0 %1054
        %v1056 = vsub.f32 %v1052, %v1055
        %v1057 = vmul.f32 %v1056, 1.442695
        %v1058 = vpow.pop %v1057
        %v1059 = vsel %vm637, %v1058, 0.0
        %1060 = vadd.xlane.f32.xlu0 %v1059
        %v1061 = vpop.xlane.xlu0 %1060
        %v1062 = vrcp.pop %v1061
        %v1063 = vmul.f32 %v1058, %v1062
        %1064 = vrot.lane.b32.xlu0 %v625, 48
        %v1065 = vpop.permute.xlu0 %1064
        %v1068 = vsel %vm637, %v1063, 0
        %1070 = vmatprep.subr.mxu0 0.0
        %1071 = vmatpush1.msra.mxu0 %v1065
        %1072 = vmatprep.subr.mxu0 0.0
        %1073 = vmatpush1.msra.mxu0 0.0
        %1074 = vmatprep.subr.mxu0 0.0
        %1075 = vmatpush1.msra.mxu0 0.0
        %1076 = vmatprep.subr.mxu0 0.0
        %1077 = vmatpush1.msra.mxu0 0.0
        %1078 = vmatprep.subr.mxu0 0.0
        %1079 = vmatpush1.msra.mxu0 0.0
        %1080 = vmatprep.subr.mxu0 0.0
        %1081 = vmatpush1.msra.mxu0 0.0
        %1082 = vmatprep.subr.mxu0 0.0
        %1083 = vmatpush1.msra.mxu0 0.0
        %1084 = vmatprep.subr.mxu0 0.0
        %1085 = vmatpush1.msra.mxu0 0.0
        %1086 = vmatprep.subr.mxu0 0.0
        %1087 = vmatpush1.msra.mxu0 0.0
        %1088 = vmatprep.subr.mxu0 0.0
        %1089 = vmatpush1.msra.mxu0 0.0
        %1090 = vmatprep.subr.mxu0 0.0
        %1091 = vmatpush1.msra.mxu0 0.0
        %1092 = vmatprep.subr.mxu0 0.0
        %1093 = vmatpush1.msra.mxu0 0.0
        %1094 = vmatprep.subr.mxu0 0.0
        %1095 = vmatpush1.msra.mxu0 0.0
        %1096 = vmatprep.subr.mxu0 0.0
        %1097 = vmatpush1.msra.mxu0 0.0
        %1098 = vmatprep.subr.mxu0 0.0
        %1099 = vmatpush1.msra.mxu0 0.0
        %1100 = vmatprep.subr.mxu0 0.0
        %1101 = vmatpush1.msra.mxu0 0.0
        %1102 = vmatprep.subr.mxu0 0.0
        %1103 = vmatpush1.msra.mxu0 0.0
        %1104 = vmatprep.subr.mxu0 0.0
        %1105 = vmatpush1.msra.mxu0 0.0
        %1106 = vmatprep.subr.mxu0 0.0
        %1107 = vmatpush1.msra.mxu0 0.0
        %1108 = vmatprep.subr.mxu0 0.0
        %1109 = vmatpush1.msra.mxu0 0.0
        %1110 = vmatprep.subr.mxu0 0.0
        %1111 = vmatpush1.msra.mxu0 0.0
        %1112 = vmatprep.subr.mxu0 0.0
        %1113 = vmatpush1.msra.mxu0 0.0
        %1114 = vmatprep.subr.mxu0 0.0
        %1115 = vmatpush1.msra.mxu0 0.0
        %1116 = vmatprep.subr.mxu0 0.0
        %1117 = vmatpush1.msra.mxu0 0.0
        %1118 = vmatprep.subr.mxu0 0.0
        %1119 = vmatpush1.msra.mxu0 0.0
        %1120 = vmatprep.subr.mxu0 0.0
        %1121 = vmatpush1.msra.mxu0 0.0
        %1122 = vmatprep.subr.mxu0 0.0
        %1123 = vmatpush1.msra.mxu0 0.0
        %1124 = vmatprep.subr.mxu0 0.0
        %1125 = vmatpush1.msra.mxu0 0.0
        %1126 = vmatprep.subr.mxu0 0.0
        %1127 = vmatpush1.msra.mxu0 0.0
        %1128 = vmatprep.subr.mxu0 0.0
        %1129 = vmatpush1.msra.mxu0 0.0
        %1130 = vmatprep.subr.mxu0 0.0
        %1131 = vmatpush1.msra.mxu0 0.0
        %1132 = vmatprep.subr.mxu0 0.0
        %1133 = vmatpush1.msra.mxu0 0.0
        %1134 = vmatprep.mubr.f32.mxu0 0.0
        %1135 = vmatmul.mubr.f32.gmra.mrb[0].mxu0 %v1068
        %v1136 = vpop.f32.mrb[0].mxu0
        %v1137 = vadd.f32 0.0, %v1136
        %v1138 = vpop.f32.mrb[0].mxu0
        %1139 = vdwg.mxu0
        %1141 = vrot.lane.b32.xlu0 %v1137, 16
        %v1142 = vpop.permute.xlu0 %1141
        %vm1144 = vcmask 195712
        %1145 = vst.msk [vmem:[#allocation2] sm:$0xff] %vm1144, %v1142
        %1146 = vrot.lane.b32.xlu0 %v628, 104
        %v1147 = vpop.permute.xlu0 %1146
        %1148 = vrot.lane.b32.xlu0 %v625, 72
        %v1149 = vpop.permute.xlu0 %1148
        %v1150 = vsel %vm637, %v1147, 0
        %v1152 = vsel %vm637, %v1149, 0
        %1154 = vmatprep.subr.mxu0 0.0
        %1155 = vmatpush1.xpose.msra.mxu0 %v1152
        %1156 = vmatprep.subr.mxu0 0.0
        %1157 = vmatpush1.xpose.msra.mxu0 0.0
        %1158 = vmatprep.subr.mxu0 0.0
        %1159 = vmatpush1.xpose.msra.mxu0 0.0
        %1160 = vmatprep.subr.mxu0 0.0
        %1161 = vmatpush1.xpose.msra.mxu0 0.0
        %1162 = vmatprep.subr.mxu0 0.0
        %1163 = vmatpush1.xpose.msra.mxu0 0.0
        %1164 = vmatprep.subr.mxu0 0.0
        %1165 = vmatpush1.xpose.msra.mxu0 0.0
        %1166 = vmatprep.subr.mxu0 0.0
        %1167 = vmatpush1.xpose.msra.mxu0 0.0
        %1168 = vmatprep.subr.mxu0 0.0
        %1169 = vmatpush1.xpose.msra.mxu0 0.0
        %1170 = vmatprep.subr.mxu0 0.0
        %1171 = vmatpush1.xpose.msra.mxu0 0.0
        %1172 = vmatprep.subr.mxu0 0.0
        %1173 = vmatpush1.xpose.msra.mxu0 0.0
        %1174 = vmatprep.subr.mxu0 0.0
        %1175 = vmatpush1.xpose.msra.mxu0 0.0
        %1176 = vmatprep.subr.mxu0 0.0
        %1177 = vmatpush1.xpose.msra.mxu0 0.0
        %1178 = vmatprep.subr.mxu0 0.0
        %1179 = vmatpush1.xpose.msra.mxu0 0.0
        %1180 = vmatprep.subr.mxu0 0.0
        %1181 = vmatpush1.xpose.msra.mxu0 0.0
        %1182 = vmatprep.subr.mxu0 0.0
        %1183 = vmatpush1.xpose.msra.mxu0 0.0
        %1184 = vmatprep.subr.mxu0 0.0
        %1185 = vmatpush1.xpose.msra.mxu0 0.0
        %1186 = vmatprep.subr.mxu0 0.0
        %1187 = vmatpush1.xpose.msra.mxu0 0.0
        %1188 = vmatprep.subr.mxu0 0.0
        %1189 = vmatpush1.xpose.msra.mxu0 0.0
        %1190 = vmatprep.subr.mxu0 0.0
        %1191 = vmatpush1.xpose.msra.mxu0 0.0
        %1192 = vmatprep.subr.mxu0 0.0
        %1193 = vmatpush1.xpose.msra.mxu0 0.0
        %1194 = vmatprep.subr.mxu0 0.0
        %1195 = vmatpush1.xpose.msra.mxu0 0.0
        %1196 = vmatprep.subr.mxu0 0.0
        %1197 = vmatpush1.xpose.msra.mxu0 0.0
        %1198 = vmatprep.subr.mxu0 0.0
        %1199 = vmatpush1.xpose.msra.mxu0 0.0
        %1200 = vmatprep.subr.mxu0 0.0
        %1201 = vmatpush1.xpose.msra.mxu0 0.0
        %1202 = vmatprep.subr.mxu0 0.0
        %1203 = vmatpush1.xpose.msra.mxu0 0.0
        %1204 = vmatprep.subr.mxu0 0.0
        %1205 = vmatpush1.xpose.msra.mxu0 0.0
        %1206 = vmatprep.subr.mxu0 0.0
        %1207 = vmatpush1.xpose.msra.mxu0 0.0
        %1208 = vmatprep.subr.mxu0 0.0
        %1209 = vmatpush1.xpose.msra.mxu0 0.0
        %1210 = vmatprep.subr.mxu0 0.0
        %1211 = vmatpush1.xpose.msra.mxu0 0.0
        %1212 = vmatprep.subr.mxu0 0.0
        %1213 = vmatpush1.xpose.msra.mxu0 0.0
        %1214 = vmatprep.subr.mxu0 0.0
        %1215 = vmatpush1.xpose.msra.mxu0 0.0
        %1216 = vmatprep.subr.mxu0 0.0
        %1217 = vmatpush1.xpose.msra.mxu0 0.0
        %1218 = vmatprep.mubr.f32.mxu0 0.0
        %1219 = vmatmul.mubr.f32.gmra.mrb[0].mxu0 %v1150
        %v1220 = vpop.f32.mrb[0].mxu0
        %v1221 = vadd.f32 0.0, %v1220
        %v1222 = vpop.f32.mrb[0].mxu0
        %1223 = vdwg.mxu0
        %v1224 = vsel %vm633, -1e+30, %v1221
        %v1225 = vsel %vm637, %v1224, -inf
        %1226 = vmax.xlane.f32.xlu0 %v1225
        %v1227 = vpop.xlane.xlu0 %1226
        %v1228 = vsub.f32 %v1224, %v1227
        %v1229 = vmul.f32 %v1228, 1.442695
        %v1230 = vpow.pop %v1229
        %v1231 = vsel %vm637, %v1230, 0.0
        %1232 = vadd.xlane.f32.xlu0 %v1231
        %v1233 = vpop.xlane.xlu0 %1232
        %v1234 = vrcp.pop %v1233
        %v1235 = vmul.f32 %v1230, %v1234
        %1236 = vrot.lane.b32.xlu0 %v625, 40
        %v1237 = vpop.permute.xlu0 %1236
        %v1240 = vsel %vm637, %v1235, 0
        %1242 = vmatprep.subr.mxu0 0.0
        %1243 = vmatpush1.msra.mxu0 %v1237
        %1244 = vmatprep.subr.mxu0 0.0
        %1245 = vmatpush1.msra.mxu0 0.0
        %1246 = vmatprep.subr.mxu0 0.0
        %1247 = vmatpush1.msra.mxu0 0.0
        %1248 = vmatprep.subr.mxu0 0.0
        %1249 = vmatpush1.msra.mxu0 0.0
        %1250 = vmatprep.subr.mxu0 0.0
        %1251 = vmatpush1.msra.mxu0 0.0
        %1252 = vmatprep.subr.mxu0 0.0
        %1253 = vmatpush1.msra.mxu0 0.0
        %1254 = vmatprep.subr.mxu0 0.0
        %1255 = vmatpush1.msra.mxu0 0.0
        %1256 = vmatprep.subr.mxu0 0.0
        %1257 = vmatpush1.msra.mxu0 0.0
        %1258 = vmatprep.subr.mxu0 0.0
        %1259 = vmatpush1.msra.mxu0 0.0
        %1260 = vmatprep.subr.mxu0 0.0
        %1261 = vmatpush1.msra.mxu0 0.0
        %1262 = vmatprep.subr.mxu0 0.0
        %1263 = vmatpush1.msra.mxu0 0.0
        %1264 = vmatprep.subr.mxu0 0.0
        %1265 = vmatpush1.msra.mxu0 0.0
        %1266 = vmatprep.subr.mxu0 0.0
        %1267 = vmatpush1.msra.mxu0 0.0
        %1268 = vmatprep.subr.mxu0 0.0
        %1269 = vmatpush1.msra.mxu0 0.0
        %1270 = vmatprep.subr.mxu0 0.0
        %1271 = vmatpush1.msra.mxu0 0.0
        %1272 = vmatprep.subr.mxu0 0.0
        %1273 = vmatpush1.msra.mxu0 0.0
        %1274 = vmatprep.subr.mxu0 0.0
        %1275 = vmatpush1.msra.mxu0 0.0
        %1276 = vmatprep.subr.mxu0 0.0
        %1277 = vmatpush1.msra.mxu0 0.0
        %1278 = vmatprep.subr.mxu0 0.0
        %1279 = vmatpush1.msra.mxu0 0.0
        %1280 = vmatprep.subr.mxu0 0.0
        %1281 = vmatpush1.msra.mxu0 0.0
        %1282 = vmatprep.subr.mxu0 0.0
        %1283 = vmatpush1.msra.mxu0 0.0
        %1284 = vmatprep.subr.mxu0 0.0
        %1285 = vmatpush1.msra.mxu0 0.0
        %1286 = vmatprep.subr.mxu0 0.0
        %1287 = vmatpush1.msra.mxu0 0.0
        %1288 = vmatprep.subr.mxu0 0.0
        %1289 = vmatpush1.msra.mxu0 0.0
        %1290 = vmatprep.subr.mxu0 0.0
        %1291 = vmatpush1.msra.mxu0 0.0
        %1292 = vmatprep.subr.mxu0 0.0
        %1293 = vmatpush1.msra.mxu0 0.0
        %1294 = vmatprep.subr.mxu0 0.0
        %1295 = vmatpush1.msra.mxu0 0.0
        %1296 = vmatprep.subr.mxu0 0.0
        %1297 = vmatpush1.msra.mxu0 0.0
        %1298 = vmatprep.subr.mxu0 0.0
        %1299 = vmatpush1.msra.mxu0 0.0
        %1300 = vmatprep.subr.mxu0 0.0
        %1301 = vmatpush1.msra.mxu0 0.0
        %1302 = vmatprep.subr.mxu0 0.0
        %1303 = vmatpush1.msra.mxu0 0.0
        %1304 = vmatprep.subr.mxu0 0.0
        %1305 = vmatpush1.msra.mxu0 0.0
        %1306 = vmatprep.mubr.f32.mxu0 0.0
        %1307 = vmatmul.mubr.f32.gmra.mrb[0].mxu0 %v1240
        %v1308 = vpop.f32.mrb[0].mxu0
        %v1309 = vadd.f32 0.0, %v1308
        %v1310 = vpop.f32.mrb[0].mxu0
        %1311 = vdwg.mxu0
        %1313 = vrot.lane.b32.xlu0 %v1309, 24
        %v1314 = vpop.permute.xlu0 %1313
        %vm1316 = vcmask 261312
        %1317 = vst.msk [vmem:[#allocation2] sm:$0xff] %vm1316, %v1314
        %v1318 = vld [vmem:[#allocation2] sm:$0xff]
        %v1319 = vld [vmem:[%s4] sm:$0xff]
        %v1320 = vld [vmem:[%s4 + $0x8] sm:$0xff]
        %v1321 = vld [vmem:[%s4 + $0x10] sm:$0xff]
        %v1322 = vld [vmem:[%s4 + $0x18] sm:$0xff]
        %v1323 = vld [vmem:[%s5] sm:$0x1]
        %v1325 = vlaneseq
        %v1326 = vshrl.u32 %v1325, 7
        %v1327 = vsub.s32 0, %v1326
        %v1328 = vrot.slane %v1323, %v1327
        %v1331 = vsel %vm520, %v1318, 0
        %1333 = vmatprep.subr.mxu0 0.0
        %1334 = vmatpush1.msra.mxu0 %v1319
        %1335 = vmatprep.subr.mxu0 0.0
        %1336 = vmatpush1.msra.mxu0 %v1320
        %1337 = vmatprep.subr.mxu0 0.0
        %1338 = vmatpush1.msra.mxu0 %v1321
        %1339 = vmatprep.subr.mxu0 0.0
        %1340 = vmatpush1.msra.mxu0 %v1322
        %1341 = vmatprep.subr.mxu0 0.0
        %1342 = vmatpush1.msra.mxu0 0.0
        %1343 = vmatprep.subr.mxu0 0.0
        %1344 = vmatpush1.msra.mxu0 0.0
        %1345 = vmatprep.subr.mxu0 0.0
        %1346 = vmatpush1.msra.mxu0 0.0
        %1347 = vmatprep.subr.mxu0 0.0
        %1348 = vmatpush1.msra.mxu0 0.0
        %1349 = vmatprep.subr.mxu0 0.0
        %1350 = vmatpush1.msra.mxu0 0.0
        %1351 = vmatprep.subr.mxu0 0.0
        %1352 = vmatpush1.msra.mxu0 0.0
        %1353 = vmatprep.subr.mxu0 0.0
        %1354 = vmatpush1.msra.mxu0 0.0
        %1355 = vmatprep.subr.mxu0 0.0
        %1356 = vmatpush1.msra.mxu0 0.0
        %1357 = vmatprep.subr.mxu0 0.0
        %1358 = vmatpush1.msra.mxu0 0.0
        %1359 = vmatprep.subr.mxu0 0.0
        %1360 = vmatpush1.msra.mxu0 0.0
        %1361 = vmatprep.subr.mxu0 0.0
        %1362 = vmatpush1.msra.mxu0 0.0
        %1363 = vmatprep.subr.mxu0 0.0
        %1364 = vmatpush1.msra.mxu0 0.0
        %1365 = vmatprep.subr.mxu0 0.0
        %1366 = vmatpush1.msra.mxu0 0.0
        %1367 = vmatprep.subr.mxu0 0.0
        %1368 = vmatpush1.msra.mxu0 0.0
        %1369 = vmatprep.subr.mxu0 0.0
        %1370 = vmatpush1.msra.mxu0 0.0
        %1371 = vmatprep.subr.mxu0 0.0
        %1372 = vmatpush1.msra.mxu0 0.0
        %1373 = vmatprep.subr.mxu0 0.0
        %1374 = vmatpush1.msra.mxu0 0.0
        %1375 = vmatprep.subr.mxu0 0.0
        %1376 = vmatpush1.msra.mxu0 0.0
        %1377 = vmatprep.subr.mxu0 0.0
        %1378 = vmatpush1.msra.mxu0 0.0
        %1379 = vmatprep.subr.mxu0 0.0
        %1380 = vmatpush1.msra.mxu0 0.0
        %1381 = vmatprep.subr.mxu0 0.0
        %1382 = vmatpush1.msra.mxu0 0.0
        %1383 = vmatprep.subr.mxu0 0.0
        %1384 = vmatpush1.msra.mxu0 0.0
        %1385 = vmatprep.subr.mxu0 0.0
        %1386 = vmatpush1.msra.mxu0 0.0
        %1387 = vmatprep.subr.mxu0 0.0
        %1388 = vmatpush1.msra.mxu0 0.0
        %1389 = vmatprep.subr.mxu0 0.0
        %1390 = vmatpush1.msra.mxu0 0.0
        %1391 = vmatprep.subr.mxu0 0.0
        %1392 = vmatpush1.msra.mxu0 0.0
        %1393 = vmatprep.subr.mxu0 0.0
        %1394 = vmatpush1.msra.mxu0 0.0
        %1395 = vmatprep.subr.mxu0 0.0
        %1396 = vmatpush1.msra.mxu0 0.0
        %1397 = vmatprep.mubr.f32.mxu0 0.0
        %1398 = vmatmul.mubr.f32.gmra.mrb[0].mxu0 %v1331
        %v1399 = vpop.f32.mrb[0].mxu0
        %v1400 = vadd.f32 %v1328, %v1399
        %v1401 = vpop.f32.mrb[0].mxu0
        %1402 = vdwg.mxu0
        %v1403 = vld [vmem:[%s6] sm:$0x1]
        %v1404 = vld [vmem:[%s7] sm:$0x1]
        %v1405 = vsel %vm520, %v1400, 0.0
        %1406 = vadd.xlane.f32.xlu0 %v1405
        %v1407 = vpop.xlane.xlu0 %1406
        %v1408 = vmul.f32 %v1407, %v524
        %v1409 = vmul.f32 %v1400, %v1400
        %v1410 = vsel %vm520, %v1409, 0.0
        %1411 = vadd.xlane.f32.xlu0 %v1410
        %v1412 = vpop.xlane.xlu0 %1411
        %v1413 = vmul.f32 %v1412, %v524
        %v1414 = vmul.f32 %v1408, %v1408
        %v1415 = vsub.f32 %v1413, %v1414
        %v1416 = vadd.f32 %v1415, 1e-05
        %v1417 = vrsqrt.pop %v1416
        %v1418 = vsub.f32 %v1400, %v1408
        %v1419 = vmul.f32 %v1418, %v1417
        %v1421 = vlaneseq
        %v1422 = vshrl.u32 %v1421, 7
        %v1423 = vsub.s32 0, %v1422
        %v1424 = vrot.slane %v1403, %v1423
        %v1426 = vmul.f32 %v1424, %v1419
        %v1428 = vlaneseq
        %v1429 = vshrl.u32 %v1428, 7
        %v1430 = vsub.s32 0, %v1429
        %v1431 = vrot.slane %v1404, %v1430
        %v1433 = vadd.f32 %v1426, %v1431
        %v1434 = vadd.f32 %v1433, %v517
        %v1435 = vld [vmem:[%s8] sm:$0x1]
        %v1436 = vld [vmem:[%s9] sm:$0x1]
        %v1437 = vsel %vm520, %v1434, 0.0
        %1438 = vadd.xlane.f32.xlu0 %v1437
        %v1439 = vpop.xlane.xlu0 %1438
        %v1440 = vmul.f32 %v1439, %v524
        %v1441 = vmul.f32 %v1434, %v1434
        %v1442 = vsel %vm520, %v1441, 0.0
        %1443 = vadd.xlane.f32.xlu0 %v1442
        %v1444 = vpop.xlane.xlu0 %1443
        %v1445 = vmul.f32 %v1444, %v524
        %v1446 = vmul.f32 %v1440, %v1440
        %v1447 = vsub.f32 %v1445, %v1446
        %v1448 = vadd.f32 %v1447, 1e-05
        %v1449 = vrsqrt.pop %v1448
        %v1450 = vsub.f32 %v1434, %v1440
        %v1451 = vmul.f32 %v1450, %v1449
        %v1453 = vlaneseq
        %v1454 = vshrl.u32 %v1453, 7
        %v1455 = vsub.s32 0, %v1454
        %v1456 = vrot.slane %v1435, %v1455
        %v1458 = vmul.f32 %v1456, %v1451
        %v1460 = vlaneseq
        %v1461 = vshrl.u32 %v1460, 7
        %v1462 = vsub.s32 0, %v1461
        %v1463 = vrot.slane %v1436, %v1462
        %v1465 = vadd.f32 %v1458, %v1463
        %v1466 = vld [vmem:[%s10] sm:$0xff]
        %v1467 = vld [vmem:[%s10 + $0x8] sm:$0xff]
        %v1468 = vld [vmem:[%s10 + $0x10] sm:$0xff]
        %v1469 = vld [vmem:[%s10 + $0x18] sm:$0xff]
        %v1470 = vld [vmem:[%s11] sm:$0x1]
        %v1472 = vlaneseq
        %v1473 = vshrl.u32 %v1472, 7
        %v1474 = vsub.s32 0, %v1473
        %v1475 = vrot.slane %v1470, %v1474
        %v1478 = vsel %vm520, %v1465, 0
        %1480 = vmatprep.subr.mxu0 0.0
        %1481 = vmatpush1.msra.mxu0 %v1466
        %1482 = vmatprep.subr.mxu0 0.0
        %1483 = vmatpush1.msra.mxu0 %v1467
        %1484 = vmatprep.subr.mxu0 0.0
        %1485 = vmatpush1.msra.mxu0 %v1468
        %1486 = vmatprep.subr.mxu0 0.0
        %1487 = vmatpush1.msra.mxu0 %v1469
        %1488 = vmatprep.subr.mxu0 0.0
        %1489 = vmatpush1.msra.mxu0 0.0
        %1490 = vmatprep.subr.mxu0 0.0
        %1491 = vmatpush1.msra.mxu0 0.0
        %1492 = vmatprep.subr.mxu0 0.0
        %1493 = vmatpush1.msra.mxu0 0.0
        %1494 = vmatprep.subr.mxu0 0.0
        %1495 = vmatpush1.msra.mxu0 0.0
        %1496 = vmatprep.subr.mxu0 0.0
        %1497 = vmatpush1.msra.mxu0 0.0
        %1498 = vmatprep.subr.mxu0 0.0
        %1499 = vmatpush1.msra.mxu0 0.0
        %1500 = vmatprep.subr.mxu0 0.0
        %1501 = vmatpush1.msra.mxu0 0.0
        %1502 = vmatprep.subr.mxu0 0.0
        %1503 = vmatpush1.msra.mxu0 0.0
        %1504 = vmatprep.subr.mxu0 0.0
        %1505 = vmatpush1.msra.mxu0 0.0
        %1506 = vmatprep.subr.mxu0 0.0
        %1507 = vmatpush1.msra.mxu0 0.0
        %1508 = vmatprep.subr.mxu0 0.0
        %1509 = vmatpush1.msra.mxu0 0.0
        %1510 = vmatprep.subr.mxu0 0.0
        %1511 = vmatpush1.msra.mxu0 0.0
        %1512 = vmatprep.subr.mxu0 0.0
        %1513 = vmatpush1.msra.mxu0 0.0
        %1514 = vmatprep.subr.mxu0 0.0
        %1515 = vmatpush1.msra.mxu0 0.0
        %1516 = vmatprep.subr.mxu0 0.0
        %1517 = vmatpush1.msra.mxu0 0.0
        %1518 = vmatprep.subr.mxu0 0.0
        %1519 = vmatpush1.msra.mxu0 0.0
        %1520 = vmatprep.subr.mxu0 0.0
        %1521 = vmatpush1.msra.mxu0 0.0
        %1522 = vmatprep.subr.mxu0 0.0
        %1523 = vmatpush1.msra.mxu0 0.0
        %1524 = vmatprep.subr.mxu0 0.0
        %1525 = vmatpush1.msra.mxu0 0.0
        %1526 = vmatprep.subr.mxu0 0.0
        %1527 = vmatpush1.msra.mxu0 0.0
        %1528 = vmatprep.subr.mxu0 0.0
        %1529 = vmatpush1.msra.mxu0 0.0
        %1530 = vmatprep.subr.mxu0 0.0
        %1531 = vmatpush1.msra.mxu0 0.0
        %1532 = vmatprep.subr.mxu0 0.0
        %1533 = vmatpush1.msra.mxu0 0.0
        %1534 = vmatprep.subr.mxu0 0.0
        %1535 = vmatpush1.msra.mxu0 0.0
        %1536 = vmatprep.subr.mxu0 0.0
        %1537 = vmatpush1.msra.mxu0 0.0
        %1538 = vmatprep.subr.mxu0 0.0
        %1539 = vmatpush1.msra.mxu0 0.0
        %1540 = vmatprep.subr.mxu0 0.0
        %1541 = vmatpush1.msra.mxu0 0.0
        %1542 = vmatprep.subr.mxu0 0.0
        %1543 = vmatpush1.msra.mxu0 0.0
        %1544 = vmatprep.mubr.f32.mxu0 0.0
        %1545 = vmatmul.mubr.f32.gmra.mrb[0].mxu0 %v1478
        %v1546 = vpop.f32.mrb[0].mxu0
        %v1547 = vadd.f32 %v1475, %v1546
        %v1548 = vpop.f32.mrb[0].mxu0
        %1549 = vdwg.mxu0
        %v1550 = vmul.f32 %v1547, 0.5
        %v1551 = vmul.f32 %v1547, 0.044715
        %v1552 = vmul.f32 %v1551, %v1547
        %v1553 = vmul.f32 %v1552, %v1547
        %v1554 = vadd.f32 %v1547, %v1553
        %v1555 = vmul.f32 %v1554, 0.7978845
        %v1556 = vtanh.pop %v1555
        %v1557 = vadd.f32 %v1556, 1.0
        %v1558 = vmul.f32 %v1550, %v1557
        %v1559 = vld [vmem:[%s12] sm:$0xff]
        %v1560 = vld [vmem:[%s12 + $0x8] sm:$0xff]
        %v1561 = vld [vmem:[%s12 + $0x10] sm:$0xff]
        %v1562 = vld [vmem:[%s12 + $0x18] sm:$0xff]
        %v1563 = vld [vmem:[%s12 + $0x20] sm:$0xff]
        %v1564 = vld [vmem:[%s12 + $0x28] sm:$0xff]
        %v1565 = vld [vmem:[%s12 + $0x30] sm:$0xff]
        %v1566 = vld [vmem:[%s12 + $0x38] sm:$0xff]
        %v1567 = vld [vmem:[%s12 + $0x40] sm:$0xff]
        %v1568 = vld [vmem:[%s12 + $0x48] sm:$0xff]
        %v1569 = vld [vmem:[%s12 + $0x50] sm:$0xff]
        %v1570 = vld [vmem:[%s12 + $0x58] sm:$0xff]
        %v1571 = vld [vmem:[%s12 + $0x60] sm:$0xff]
        %v1572 = vld [vmem:[%s12 + $0x68] sm:$0xff]
        %v1573 = vld [vmem:[%s12 + $0x70] sm:$0xff]
        %v1574 = vld [vmem:[%s12 + $0x78] sm:$0xff]
        %v1575 = vld [vmem:[%s13] sm:$0x1]
        %v1577 = vlaneseq
        %v1578 = vshrl.u32 %v1577, 7
        %v1579 = vsub.s32 0, %v1578
        %v1580 = vrot.slane %v1575, %v1579
        %1582 = vmatprep.subr.mxu0 0.0
        %1583 = vmatpush1.msra.mxu0 %v1559
        %1584 = vmatprep.subr.mxu0 0.0
        %1585 = vmatpush1.msra.mxu0 %v1560
        %1586 = vmatprep.subr.mxu0 0.0
        %1587 = vmatpush1.msra.mxu0 %v1561
        %1588 = vmatprep.subr.mxu0 0.0
        %1589 = vmatpush1.msra.mxu0 %v1562
        %1590 = vmatprep.subr.mxu0 0.0
        %1591 = vmatpush1.msra.mxu0 %v1563
        %1592 = vmatprep.subr.mxu0 0.0
        %1593 = vmatpush1.msra.mxu0 %v1564
        %1594 = vmatprep.subr.mxu0 0.0
        %1595 = vmatpush1.msra.mxu0 %v1565
        %1596 = vmatprep.subr.mxu0 0.0
        %1597 = vmatpush1.msra.mxu0 %v1566
        %1598 = vmatprep.subr.mxu0 0.0
        %1599 = vmatpush1.msra.mxu0 %v1567
        %1600 = vmatprep.subr.mxu0 0.0
        %1601 = vmatpush1.msra.mxu0 %v1568
        %1602 = vmatprep.subr.mxu0 0.0
        %1603 = vmatpush1.msra.mxu0 %v1569
        %1604 = vmatprep.subr.mxu0 0.0
        %1605 = vmatpush1.msra.mxu0 %v1570
        %1606 = vmatprep.subr.mxu0 0.0
        %1607 = vmatpush1.msra.mxu0 %v1571
        %1608 = vmatprep.subr.mxu0 0.0
        %1609 = vmatpush1.msra.mxu0 %v1572
        %1610 = vmatprep.subr.mxu0 0.0
        %1611 = vmatpush1.msra.mxu0 %v1573
        %1612 = vmatprep.subr.mxu0 0.0
        %1613 = vmatpush1.msra.mxu0 %v1574
        %1614 = vmatprep.subr.mxu0 0.0
        %1615 = vmatpush1.msra.mxu0 0.0
        %1616 = vmatprep.subr.mxu0 0.0
        %1617 = vmatpush1.msra.mxu0 0.0
        %1618 = vmatprep.subr.mxu0 0.0
        %1619 = vmatpush1.msra.mxu0 0.0
        %1620 = vmatprep.subr.mxu0 0.0
        %1621 = vmatpush1.msra.mxu0 0.0
        %1622 = vmatprep.subr.mxu0 0.0
        %1623 = vmatpush1.msra.mxu0 0.0
        %1624 = vmatprep.subr.mxu0 0.0
        %1625 = vmatpush1.msra.mxu0 0.0
        %1626 = vmatprep.subr.mxu0 0.0
        %1627 = vmatpush1.msra.mxu0 0.0
        %1628 = vmatprep.subr.mxu0 0.0
        %1629 = vmatpush1.msra.mxu0 0.0
        %1630 = vmatprep.subr.mxu0 0.0
        %1631 = vmatpush1.msra.mxu0 0.0
        %1632 = vmatprep.subr.mxu0 0.0
        %1633 = vmatpush1.msra.mxu0 0.0
        %1634 = vmatprep.subr.mxu0 0.0
        %1635 = vmatpush1.msra.mxu0 0.0
        %1636 = vmatprep.subr.mxu0 0.0
        %1637 = vmatpush1.msra.mxu0 0.0
        %1638 = vmatprep.subr.mxu0 0.0
        %1639 = vmatpush1.msra.mxu0 0.0
        %1640 = vmatprep.subr.mxu0 0.0
        %1641 = vmatpush1.msra.mxu0 0.0
        %1642 = vmatprep.subr.mxu0 0.0
        %1643 = vmatpush1.msra.mxu0 0.0
        %1644 = vmatprep.subr.mxu0 0.0
        %1645 = vmatpush1.msra.mxu0 0.0
        %1646 = vmatprep.mubr.f32.mxu0 0.0
        %1647 = vmatmul.mubr.f32.gmra.mrb[0].mxu0 %v1558
        %v1648 = vpop.f32.mrb[0].mxu0
        %v1649 = vadd.f32 %v1580, %v1648
        %v1650 = vpop.f32.mrb[0].mxu0
        %1651 = vdwg.mxu0
        %v1652 = vld [vmem:[%s14] sm:$0x1]
        %v1653 = vld [vmem:[%s15] sm:$0x1]
        %v1654 = vsel %vm520, %v1649, 0.0
        %1655 = vadd.xlane.f32.xlu0 %v1654
        %v1656 = vpop.xlane.xlu0 %1655
        %v1657 = vmul.f32 %v1656, %v524
        %v1658 = vmul.f32 %v1649, %v1649
        %v1659 = vsel %vm520, %v1658, 0.0
        %1660 = vadd.xlane.f32.xlu0 %v1659
        %v1661 = vpop.xlane.xlu0 %1660
        %v1662 = vmul.f32 %v1661, %v524
        %v1663 = vmul.f32 %v1657, %v1657
        %v1664 = vsub.f32 %v1662, %v1663
        %v1665 = vadd.f32 %v1664, 1e-05
        %v1666 = vrsqrt.pop %v1665
        %v1667 = vsub.f32 %v1649, %v1657
        %v1668 = vmul.f32 %v1667, %v1666
        %v1670 = vlaneseq
        %v1671 = vshrl.u32 %v1670, 7
        %v1672 = vsub.s32 0, %v1671
        %v1673 = vrot.slane %v1652, %v1672
        %v1675 = vmul.f32 %v1673, %v1668
        %v1677 = vlaneseq
        %v1678 = vshrl.u32 %v1677, 7
        %v1679 = vsub.s32 0, %v1678
        %v1680 = vrot.slane %v1653, %v1679
        %v1682 = vadd.f32 %v1675, %v1680
        %v1683 = vadd.f32 %v1682, %v1434
        %1684 = vst.msk [vmem:[%s512] sm:$0xff] %vm520, %v1683
        %s1685 = sand.u32 %s379, 1
        %s1686 = scalar_lea.sflag [#allocation4], %s1685
        %s1687 = sand.u32 %s379, 1
        %s1688 = smul.addr %s1687, 8
        %s1689 = scalar_lea.vmem [#allocation3], %s1688
        // Predicated region
        $region85: #{tpu_custom_call.1} parent=83 // pred_check
          %p1690 = pneg %p389
        $region86: #{tpu_custom_call.1} parent=83 // pred_check_branch
          %1692 = sbr.rel (%p1690) target = $region88
        $region87: #{tpu_custom_call.1} parent=83 // pred_region
          %s1694 = ssub.s32 128, 128
          %1695 = vsyncadd %s1686, %s1694
          %s1696 = smul.addr %s30, 128
          %s1697 = scalar_lea.hbm %s16, %s1696
          %s1699 = sshll.u32 %s1689, 4
          %s1700 = int_to_ptr.vmem [resolvable:$true] %s1699
          %1702 = dma.vmem_to_hbm [thread:$0]  %s1700, 128, %s1697, %s1686
        $region88: #{tpu_custom_call.1} parent=83 // pred_fallthru
          _
      $region84: #{tpu_custom_call.1} parent=5 // pred_fallthru
        _
      %p1703 = scmp.le.s32.totalorder 2, %s25
      // Predicated region
      $region89: #{tpu_custom_call.1} parent=5 // pred_check
        %p1704 = pneg %p1703
      $region90: #{tpu_custom_call.1} parent=5 // pred_check_branch
        %1706 = sbr.rel (%p1704) target = $region92
      $region91: #{tpu_custom_call.1} parent=5 // pred_region
        %s1707 = ssub.s32 %s25, 2
        // Predicated region
        $region93: #{tpu_custom_call.1} parent=91 // pred_check
          %p1708 = pneg %p395
        $region94: #{tpu_custom_call.1} parent=91 // pred_check_branch
          %1710 = sbr.rel (%p1708) target = $region96
        $region95: #{tpu_custom_call.1} parent=91 // pred_region
          %s1711 = sand.u32 %s380, 1
          %s1712 = scalar_lea.sflag [#allocation4], %s1711
          %s1713 = sand.u32 %s380, 1
          %s1714 = smul.addr %s1713, 8
          %s1715 = scalar_lea.vmem [#allocation3], %s1714
          %1716 = dma.done %s1712, 128
        $region96: #{tpu_custom_call.1} parent=91 // pred_fallthru
          _
      $region92: #{tpu_custom_call.1} parent=5 // pred_fallthru
        _
    $region6: #{tpu_custom_call.1} parent=1 // loop_footer
      %s29 = sadd.s32 1, %s25
    $region7: #{tpu_custom_call.1} parent=1 // loop_footer_branch
      %24 = sbr.rel target = $region3
    $region8: #{tpu_custom_call.1} parent=1 // loop_exit
      _
    %1717 = vsyncpa [#allocation4], 1
    %s1718 = scalar_lea.sflag [#allocation4], 1
    %1719 = vsyncpa %s1718, 1

</llo_original>
